<compile_context>
chip_gen: v7x
topology: tpu7x:2x2x1
jax: 0.10.0
libtpu: 0.0.40
codegen_flags: <defaults>
</compile_context>

<pallas_src>
import jax
import jax.numpy as jnp
from jax.experimental import pallas as pl
from jax.experimental.pallas import tpu as pltpu

B = 2            # batch
S = 8            # sequence length
E = 32           # embedding dim of the synthetic backbone
V = 32           # vocab size of the synthetic backbone
H = 768          # per-model pooled feature dim (cat -> 1536, matches classifier)
NUM_CLASSES = 2
C_PAD = 128      # lane-dense padded classifier width (cols >= NUM_CLASSES are zero)


# ---------------------------------------------------------------------------
# Fused Pallas kernel: gather + backbone A + backbone B + relu/cat/classifier
# ---------------------------------------------------------------------------
def ensemble_kernel(ids_ref, mask_ref,
                    emb_a_ref, w_a_ref, b_a_ref,
                    emb_b_ref, w_b_ref, b_b_ref,
                    w_cls_ref, b_cls_ref,
                    o_ref):
    ids = ids_ref[...]                                     # [B, S] int32
    mask = mask_ref[...]                                   # [B, S] f32

    # --- embedding gather + masked mean-pool, expressed as a one-hot matmul ---
    # wv[b, v] = sum_s mask[b, s] * (ids[b, s] == v) / max(sum_s mask[b, s], 1)
    vocab = jax.lax.broadcasted_iota(jnp.int32, (B, S, V), 2)
    onehot = (ids[:, :, None] == vocab).astype(jnp.float32)           # [B, S, V]
    denom = jnp.maximum(jnp.sum(mask, axis=1, keepdims=True), 1.0)    # [B, 1]
    wv = jnp.sum(onehot * mask[:, :, None], axis=1) / denom           # [B, V]

    pooled_a = jnp.dot(wv, emb_a_ref[...],
                       preferred_element_type=jnp.float32)            # [B, E]
    pooled_b = jnp.dot(wv, emb_b_ref[...],
                       preferred_element_type=jnp.float32)            # [B, E]

    # --- backbone dense + tanh -> per-model 768-d features (fc == Identity) ---
    feat_a = jnp.tanh(jnp.dot(pooled_a, w_a_ref[...],
                              preferred_element_type=jnp.float32) + b_a_ref[...])
    feat_b = jnp.tanh(jnp.dot(pooled_b, w_b_ref[...],
                              preferred_element_type=jnp.float32) + b_b_ref[...])

    # --- classifier(relu(cat(x1, x2))) == relu(x1)@W[:H] + relu(x2)@W[H:] + b ---
    h_a = jnp.maximum(feat_a, 0.0)                                    # [B, H]
    h_b = jnp.maximum(feat_b, 0.0)                                    # [B, H]
    w1 = w_cls_ref[pl.ds(0, H), :]                                    # static ref view
    w2 = w_cls_ref[pl.ds(H, H), :]                                    # static ref view
    logits = (jnp.dot(h_a, w1, preferred_element_type=jnp.float32)
              + jnp.dot(h_b, w2, preferred_element_type=jnp.float32)
              + b_cls_ref[...])                                       # [B, C_PAD]
    o_ref[...] = logits                                               # lane-dense store


# ---------------------------------------------------------------------------
# Wrapper
# ---------------------------------------------------------------------------
_VMEM_SPEC = pl.BlockSpec(memory_space=pltpu.MemorySpace.VMEM)


@jax.jit
def my_ensemble_forward(x_ids, mask, params):
    """Full MyEnsemble.forward.

    x_ids: [B, S] int32 token ids, mask: [B, S] float32 attention mask.
    Returns logits [B, 2].
    """
    # TODO(synk): when B grows, add a batch grid axis marked "parallel"
    # (v7x 2-TC sharding) and re-derive tile sizes against 64 MiB VMEM.
    logits_pad = pl.pallas_call(
        ensemble_kernel,
        out_shape=jax.ShapeDtypeStruct((B, C_PAD), jnp.float32),
        in_specs=[_VMEM_SPEC] * 10,
        out_specs=_VMEM_SPEC,
    )(x_ids, mask,
      params["emb_A"], params["w_A"], params["b_A"],
      params["emb_B"], params["w_B"], params["b_B"],
      params["w_cls_pad"], params["b_cls_pad"])
    return logits_pad[:, :NUM_CLASSES]


def init_params(key):
    keys = jax.random.split(key, 8)
    scale = 0.02
    return {
        "emb_A": scale * jax.random.normal(keys[0], (V, E), jnp.float32),
        "w_A":   scale * jax.random.normal(keys[1], (E, H), jnp.float32),
        "b_A":   scale * jax.random.normal(keys[2], (1, H), jnp.float32),
        "emb_B": scale * jax.random.normal(keys[3], (V, E), jnp.float32),
        "w_B":   scale * jax.random.normal(keys[4], (E, H), jnp.float32),
        "b_B":   scale * jax.random.normal(keys[5], (1, H), jnp.float32),
        "w_cls": scale * jax.random.normal(keys[6], (2 * H, NUM_CLASSES), jnp.float32),
        "b_cls": scale * jax.random.normal(keys[7], (1, NUM_CLASSES), jnp.float32),
    }


def pad_classifier_params(params):
    """One-time prep (outside the hot forward): pad Linear(1536, 2) weights to a
    lane-dense 128-column layout; extra columns are zero and sliced off after
    the kernel."""
    w_pad = jnp.zeros((2 * H, C_PAD), jnp.float32).at[:, :NUM_CLASSES].set(params["w_cls"])
    b_pad = jnp.zeros((1, C_PAD), jnp.float32).at[:, :NUM_CLASSES].set(params["b_cls"])
    out = dict(params)
    out["w_cls_pad"] = w_pad
    out["b_cls_pad"] = b_pad
    return out


def reference_forward(x_ids, mask, params):
    """Pure-JAX reference (same math, standard ops) for a correctness check."""
    def backbone(emb_table, w, b):
        emb = jnp.take(emb_table, x_ids, axis=0)                        # [B, S, E]
        summed = jnp.sum(emb * mask[..., None], axis=1)                 # [B, E]
        denom = jnp.maximum(jnp.sum(mask, axis=1, keepdims=True), 1.0)  # [B, 1]
        return jnp.tanh((summed / denom) @ w + b)                       # [B, H]

    x1 = backbone(params["emb_A"], params["w_A"], params["b_A"])
    x2 = backbone(params["emb_B"], params["w_B"], params["b_B"])
    x = jnp.concatenate([x1, x2], axis=1)                               # [B, 2H]
    return jnp.maximum(x, 0.0) @ params["w_cls"] + params["b_cls"]      # [B, 2]


if __name__ == "__main__":
    key = jax.random.PRNGKey(0)
    k_param, k_ids = jax.random.split(key, 2)

    params = pad_classifier_params(init_params(k_param))

    x_ids = jax.random.randint(k_ids, (B, S), 0, V, dtype=jnp.int32)
    # attention mask: first few positions valid
    lens = jnp.array([S, S // 2], dtype=jnp.int32)
    mask = (jnp.arange(S)[None, :] < lens[:, None]).astype(jnp.float32)

    logits = my_ensemble_forward(x_ids, mask, params)
    logits = jax.block_until_ready(logits)

    assert logits.shape == (B, NUM_CLASSES)
    assert logits.dtype == jnp.float32

    ref = reference_forward(x_ids, mask, params)
    assert jnp.allclose(logits, ref, atol=1e-4, rtol=1e-3), (logits, ref)

    print("KERNEL_OK")
</pallas_src>

<mosaic_0001>
module attributes {stable_mosaic.version = 11 : i64} {
  func.func @ensemble_kernel(%arg0: memref<2x8xi32, #tpu.memory_space<vmem>>, %arg1: memref<2x8xf32, #tpu.memory_space<vmem>>, %arg2: memref<32x32xf32, #tpu.memory_space<vmem>>, %arg3: memref<32x768xf32, #tpu.memory_space<vmem>>, %arg4: memref<1x768xf32, #tpu.memory_space<vmem>>, %arg5: memref<32x32xf32, #tpu.memory_space<vmem>>, %arg6: memref<32x768xf32, #tpu.memory_space<vmem>>, %arg7: memref<1x768xf32, #tpu.memory_space<vmem>>, %arg8: memref<1536x128xf32, #tpu.memory_space<vmem>>, %arg9: memref<1x128xf32, #tpu.memory_space<vmem>>, %arg10: memref<2x128xf32, #tpu.memory_space<vmem>>) attributes {dimension_semantics = [], scalar_prefetch = 0 : i64, scratch_operands = 0 : i64, tpu.core_type = #tpu.core_type<tc>} {
    %c0 = arith.constant 0 : index
    %c0_0 = arith.constant 0 : index
    %0 = vector.load %arg0[%c0, %c0_0] : memref<2x8xi32, #tpu.memory_space<vmem>>, vector<2x8xi32>
    %c0_1 = arith.constant 0 : index
    %c0_2 = arith.constant 0 : index
    %1 = vector.load %arg1[%c0_1, %c0_2] : memref<2x8xf32, #tpu.memory_space<vmem>>, vector<2x8xf32>
    %2 = tpu.iota {dimensions = array<i32: 2>} : vector<2x8x32xi32>
    %3 = vector.shape_cast %0 : vector<2x8xi32> to vector<2x8x1xi32>
    %4 = vector.broadcast %3 : vector<2x8x1xi32> to vector<2x8x32xi32>
    %5 = arith.cmpi eq, %4, %2 : vector<2x8x32xi32>
    %6 = arith.extui %5 : vector<2x8x32xi1> to vector<2x8x32xi32>
    %7 = arith.sitofp %6 : vector<2x8x32xi32> to vector<2x8x32xf32>
    %cst = arith.constant dense<0.000000e+00> : vector<2xf32>
    %8 = vector.multi_reduction <add>, %1, %cst [1] : vector<2x8xf32> to vector<2xf32>
    %9 = vector.shape_cast %8 : vector<2xf32> to vector<2x1xf32>
    %cst_3 = arith.constant 1.000000e+00 : f32
    %10 = vector.broadcast %cst_3 : f32 to vector<2x1xf32>
    %11 = arith.maximumf %9, %10 : vector<2x1xf32>
    %12 = vector.shape_cast %1 : vector<2x8xf32> to vector<2x8x1xf32>
    %13 = vector.broadcast %12 : vector<2x8x1xf32> to vector<2x8x32xf32>
    %14 = arith.mulf %7, %13 : vector<2x8x32xf32>
    %cst_4 = arith.constant dense<0.000000e+00> : vector<2x32xf32>
    %15 = vector.multi_reduction <add>, %14, %cst_4 [1] : vector<2x8x32xf32> to vector<2x32xf32>
    %16 = vector.broadcast %11 : vector<2x1xf32> to vector<2x32xf32>
    %17 = arith.divf %15, %16 : vector<2x32xf32>
    %c0_5 = arith.constant 0 : index
    %c0_6 = arith.constant 0 : index
    %18 = vector.load %arg2[%c0_5, %c0_6] : memref<32x32xf32, #tpu.memory_space<vmem>>, vector<32x32xf32>
    %cst_7 = arith.constant dense<0.000000e+00> : vector<2x32xf32>
    %19 = tpu.matmul %17, %18, %cst_7 {dimension_numbers = #tpu.dot_dimension_numbers<[1], [0], [0], [1], [0, 0, 1, 1], [], []>} : vector<2x32xf32>, vector<32x32xf32>, vector<2x32xf32> -> vector<2x32xf32>
    %c0_8 = arith.constant 0 : index
    %c0_9 = arith.constant 0 : index
    %20 = vector.load %arg5[%c0_8, %c0_9] : memref<32x32xf32, #tpu.memory_space<vmem>>, vector<32x32xf32>
    %cst_10 = arith.constant dense<0.000000e+00> : vector<2x32xf32>
    %21 = tpu.matmul %17, %20, %cst_10 {dimension_numbers = #tpu.dot_dimension_numbers<[1], [0], [0], [1], [0, 0, 1, 1], [], []>} : vector<2x32xf32>, vector<32x32xf32>, vector<2x32xf32> -> vector<2x32xf32>
    %c0_11 = arith.constant 0 : index
    %c0_12 = arith.constant 0 : index
    %22 = vector.load %arg3[%c0_11, %c0_12] : memref<32x768xf32, #tpu.memory_space<vmem>>, vector<32x768xf32>
    %cst_13 = arith.constant dense<0.000000e+00> : vector<2x768xf32>
    %23 = tpu.matmul %19, %22, %cst_13 {dimension_numbers = #tpu.dot_dimension_numbers<[1], [0], [0], [1], [0, 0, 1, 1], [], []>} : vector<2x32xf32>, vector<32x768xf32>, vector<2x768xf32> -> vector<2x768xf32>
    %c0_14 = arith.constant 0 : index
    %c0_15 = arith.constant 0 : index
    %24 = vector.load %arg4[%c0_14, %c0_15] : memref<1x768xf32, #tpu.memory_space<vmem>>, vector<1x768xf32>
    %25 = vector.broadcast %24 : vector<1x768xf32> to vector<2x768xf32>
    %26 = arith.addf %23, %25 : vector<2x768xf32>
    %27 = math.tanh %26 : vector<2x768xf32>
    %c0_16 = arith.constant 0 : index
    %c0_17 = arith.constant 0 : index
    %28 = vector.load %arg6[%c0_16, %c0_17] : memref<32x768xf32, #tpu.memory_space<vmem>>, vector<32x768xf32>
    %cst_18 = arith.constant dense<0.000000e+00> : vector<2x768xf32>
    %29 = tpu.matmul %21, %28, %cst_18 {dimension_numbers = #tpu.dot_dimension_numbers<[1], [0], [0], [1], [0, 0, 1, 1], [], []>} : vector<2x32xf32>, vector<32x768xf32>, vector<2x768xf32> -> vector<2x768xf32>
    %c0_19 = arith.constant 0 : index
    %c0_20 = arith.constant 0 : index
    %30 = vector.load %arg7[%c0_19, %c0_20] : memref<1x768xf32, #tpu.memory_space<vmem>>, vector<1x768xf32>
    %31 = vector.broadcast %30 : vector<1x768xf32> to vector<2x768xf32>
    %32 = arith.addf %29, %31 : vector<2x768xf32>
    %33 = math.tanh %32 : vector<2x768xf32>
    %cst_21 = arith.constant 0.000000e+00 : f32
    %34 = vector.broadcast %cst_21 : f32 to vector<2x768xf32>
    %35 = arith.maximumf %27, %34 : vector<2x768xf32>
    %cst_22 = arith.constant 0.000000e+00 : f32
    %36 = vector.broadcast %cst_22 : f32 to vector<2x768xf32>
    %37 = arith.maximumf %33, %36 : vector<2x768xf32>
    %c0_23 = arith.constant 0 : index
    %c0_24 = arith.constant 0 : index
    %38 = vector.load %arg8[%c0_23, %c0_24] : memref<1536x128xf32, #tpu.memory_space<vmem>>, vector<768x128xf32>
    %c768 = arith.constant 768 : index
    %c0_25 = arith.constant 0 : index
    %39 = vector.load %arg8[%c768, %c0_25] : memref<1536x128xf32, #tpu.memory_space<vmem>>, vector<768x128xf32>
    %cst_26 = arith.constant dense<0.000000e+00> : vector<2x128xf32>
    %40 = tpu.matmul %35, %38, %cst_26 {dimension_numbers = #tpu.dot_dimension_numbers<[1], [0], [0], [1], [0, 0, 1, 1], [], []>} : vector<2x768xf32>, vector<768x128xf32>, vector<2x128xf32> -> vector<2x128xf32>
    %cst_27 = arith.constant dense<0.000000e+00> : vector<2x128xf32>
    %41 = tpu.matmul %37, %39, %cst_27 {dimension_numbers = #tpu.dot_dimension_numbers<[1], [0], [0], [1], [0, 0, 1, 1], [], []>} : vector<2x768xf32>, vector<768x128xf32>, vector<2x128xf32> -> vector<2x128xf32>
    %42 = arith.addf %40, %41 : vector<2x128xf32>
    %c0_28 = arith.constant 0 : index
    %c0_29 = arith.constant 0 : index
    %43 = vector.load %arg9[%c0_28, %c0_29] : memref<1x128xf32, #tpu.memory_space<vmem>>, vector<1x128xf32>
    %44 = vector.broadcast %43 : vector<1x128xf32> to vector<2x128xf32>
    %45 = arith.addf %42, %44 : vector<2x128xf32>
    %c0_30 = arith.constant 0 : index
    %c0_31 = arith.constant 0 : index
    %46 = vector.load %arg10[%c0_30, %c0_31] : memref<2x128xf32, #tpu.memory_space<vmem>>, vector<2x128xf32>
    tpu.vector_store %arg10[%c0_30, %c0_31], %45 {strides = array<i32>} : memref<2x128xf32, #tpu.memory_space<vmem>>, vector<2x128xf32>,
    return
  }
}

</mosaic_0001>

<llo_original>
// kernel: my_ensemble_forward.1
$region0: #{my_ensemble_forward.1}
  #allocation0 [shape = 'u32[]', space=smem, size = 0x4, offset = 0x4, fixed_abs, tag = 'smem constant byte address 0x4 - core index']
  #allocation1 [shape = 'u32[144,128]{1,0:T(1,128)}', space=vmem, size = 0x12000, scoped, tag = 'internal scratch']
  %s0 = inlined_call_operand.hbm [shape: s32[2,8], index: 0, kind: input, shape index: {}]
  %s1 = inlined_call_operand.hbm [shape: f32[2,8], index: 1, kind: input, shape index: {}]
  %s2 = inlined_call_operand.hbm [shape: f32[32,32], index: 2, kind: input, shape index: {}]
  %s3 = inlined_call_operand.hbm [shape: f32[32,768], index: 3, kind: input, shape index: {}]
  %s4 = inlined_call_operand.vmem [shape: f32[1,768], index: 4, kind: input, shape index: {}]
  %s5 = inlined_call_operand.hbm [shape: f32[32,32], index: 5, kind: input, shape index: {}]
  %s6 = inlined_call_operand.hbm [shape: f32[32,768], index: 6, kind: input, shape index: {}]
  %s7 = inlined_call_operand.hbm [shape: f32[1,768], index: 7, kind: input, shape index: {}]
  %s8 = inlined_call_operand.hbm [shape: f32[1536,128], index: 8, kind: input, shape index: {}]
  %s9 = inlined_call_operand.vmem [shape: f32[1,128], index: 9, kind: input, shape index: {}]
  %s10 = inlined_call_operand.hbm [shape: f32[2,128], index: 10, kind: output, shape index: {}]
  %s11 = sld [smem:[#allocation0]]
  $region82: #{my_ensemble_forward.1} parent=0
    _
  %s13 = ssub.s32 1, %s11
  %s14 = scalar_select 0, %s13, %s11
  $region1: #{my_ensemble_forward.1} parent=0
    #allocation2 [shape = 'u8[1024]{0}', space=vmem, size = 0x400, scoped, tag = 'input window, operand 0, single buffered']
    #allocation3 [shape = 's32[1]{0}', space=sflag, size = 0x4, scoped, tag = 'scoped memory for my_ensemble_forward.1']
    #allocation4 [shape = 's32[1]{0}', space=sflag, size = 0x4, scoped, tag = 'scoped memory for my_ensemble_forward.1']
    #allocation5 [shape = 'u8[1024]{0}', space=vmem, size = 0x400, scoped, tag = 'input window, operand 1, single buffered']
    #allocation6 [shape = 's32[1]{0}', space=sflag, size = 0x4, scoped, tag = 'scoped memory for my_ensemble_forward.1']
    #allocation7 [shape = 'u8[16384]{0}', space=vmem, size = 0x4000, scoped, tag = 'input window, operand 2, single buffered']
    #allocation8 [shape = 'u8[98304]{0}', space=vmem, size = 0x18000, scoped, tag = 'input window, operand 3, single buffered']
    #allocation9 [shape = 's32[1]{0}', space=sflag, size = 0x4, scoped, tag = 'scoped memory for my_ensemble_forward.1']
    #allocation10 [shape = 'u8[16384]{0}', space=vmem, size = 0x4000, scoped, tag = 'input window, operand 5, single buffered']
    #allocation11 [shape = 'u8[98304]{0}', space=vmem, size = 0x18000, scoped, tag = 'input window, operand 6, single buffered']
    #allocation12 [shape = 's32[1]{0}', space=sflag, size = 0x4, scoped, tag = 'scoped memory for my_ensemble_forward.1']
    #allocation13 [shape = 'u8[3072]{0}', space=vmem, size = 0xc00, scoped, tag = 'input window, operand 7, single buffered']
    #allocation14 [shape = 'u8[786432]{0}', space=vmem, size = 0xc0000, scoped, tag = 'input window, operand 8, single buffered']
    #allocation15 [shape = 's32[1]{0}', space=sflag, size = 0x4, scoped, tag = 'scoped memory for my_ensemble_forward.1']
    #allocation16 [shape = 'u8[1024]{0}', space=vmem, size = 0x400, scoped, tag = 'output window, operand 0, single buffered']
    %15 = vsyncpa [#allocation3], 0
    %16 = vsyncpa [#allocation6], 0
    %17 = vsyncpa [#allocation9], 0
    %18 = vsyncpa [#allocation12], 0
    %19 = vsyncpa [#allocation15], 0
    %20 = vsyncpa [#allocation4], 0
    // Predicated region
    $region2: #{my_ensemble_forward.1} parent=1 // pred_check
      _
    $region3: #{my_ensemble_forward.1} parent=1 // pred_check_branch
      %22 = sbr.rel (0) target = $region5
    $region4: #{my_ensemble_forward.1} parent=1 // pred_region
      %s24 = ssub.s32 32, 32
      %25 = vsyncadd [#allocation3], %s24
      %s27 = sshll.u32 [#allocation2], 4
      %s28 = int_to_ptr.vmem [resolvable:$true] %s27
      %30 = dma.hbm_to_vmem [thread:$0]  %s0, 32, %s28, [#allocation3]
    $region5: #{my_ensemble_forward.1} parent=1 // pred_fallthru
      _
    // Predicated region
    $region6: #{my_ensemble_forward.1} parent=1 // pred_check
      _
    $region7: #{my_ensemble_forward.1} parent=1 // pred_check_branch
      %32 = sbr.rel (0) target = $region9
    $region8: #{my_ensemble_forward.1} parent=1 // pred_region
      %s34 = ssub.s32 32, 32
      %35 = vsyncadd [#allocation6], %s34
      %s37 = sshll.u32 [#allocation5], 4
      %s38 = int_to_ptr.vmem [resolvable:$true] %s37
      %40 = dma.hbm_to_vmem [thread:$0]  %s1, 32, %s38, [#allocation6]
    $region9: #{my_ensemble_forward.1} parent=1 // pred_fallthru
      _
    // Predicated region
    $region10: #{my_ensemble_forward.1} parent=1 // pred_check
      _
    $region11: #{my_ensemble_forward.1} parent=1 // pred_check_branch
      %42 = sbr.rel (0) target = $region13
    $region12: #{my_ensemble_forward.1} parent=1 // pred_region
      %s44 = ssub.s32 512, 512
      %45 = vsyncadd [#allocation6], %s44
      %s46 = sshll.u32 [#allocation7], 4
      %s47 = int_to_ptr.vmem [resolvable:$true] %s46
      %52 = dma.hbm_to_vmem [thread:$0]  %s2, 512, %s47, [#allocation6], 128, 128, 8
    $region13: #{my_ensemble_forward.1} parent=1 // pred_fallthru
      _
    // Predicated region
    $region14: #{my_ensemble_forward.1} parent=1 // pred_check
      _
    $region15: #{my_ensemble_forward.1} parent=1 // pred_check_branch
      %54 = sbr.rel (0) target = $region17
    $region16: #{my_ensemble_forward.1} parent=1 // pred_region
      %s56 = ssub.s32 3072, 3072
      %57 = vsyncadd [#allocation9], %s56
      %s58 = sshll.u32 [#allocation8], 4
      %s59 = int_to_ptr.vmem [resolvable:$true] %s58
      %64 = dma.hbm_to_vmem [thread:$0]  %s3, 3072, %s59, [#allocation9], 768, 768, 48
    $region17: #{my_ensemble_forward.1} parent=1 // pred_fallthru
      _
    // Predicated region
    $region18: #{my_ensemble_forward.1} parent=1 // pred_check
      _
    $region19: #{my_ensemble_forward.1} parent=1 // pred_check_branch
      %66 = sbr.rel (0) target = $region21
    $region20: #{my_ensemble_forward.1} parent=1 // pred_region
      _
    $region21: #{my_ensemble_forward.1} parent=1 // pred_fallthru
      _
    // Predicated region
    $region22: #{my_ensemble_forward.1} parent=1 // pred_check
      _
    $region23: #{my_ensemble_forward.1} parent=1 // pred_check_branch
      %68 = sbr.rel (0) target = $region25
    $region24: #{my_ensemble_forward.1} parent=1 // pred_region
      %s70 = ssub.s32 512, 512
      %71 = vsyncadd [#allocation9], %s70
      %s72 = sshll.u32 [#allocation10], 4
      %s73 = int_to_ptr.vmem [resolvable:$true] %s72
      %78 = dma.hbm_to_vmem [thread:$0]  %s5, 512, %s73, [#allocation9], 128, 128, 8
    $region25: #{my_ensemble_forward.1} parent=1 // pred_fallthru
      _
    // Predicated region
    $region26: #{my_ensemble_forward.1} parent=1 // pred_check
      _
    $region27: #{my_ensemble_forward.1} parent=1 // pred_check_branch
      %80 = sbr.rel (0) target = $region29
    $region28: #{my_ensemble_forward.1} parent=1 // pred_region
      %s82 = ssub.s32 3072, 3072
      %83 = vsyncadd [#allocation12], %s82
      %s84 = sshll.u32 [#allocation11], 4
      %s85 = int_to_ptr.vmem [resolvable:$true] %s84
      %90 = dma.hbm_to_vmem [thread:$0]  %s6, 3072, %s85, [#allocation12], 768, 768, 48
    $region29: #{my_ensemble_forward.1} parent=1 // pred_fallthru
      _
    // Predicated region
    $region30: #{my_ensemble_forward.1} parent=1 // pred_check
      _
    $region31: #{my_ensemble_forward.1} parent=1 // pred_check_branch
      %92 = sbr.rel (0) target = $region33
    $region32: #{my_ensemble_forward.1} parent=1 // pred_region
      %s94 = ssub.s32 96, 96
      %95 = vsyncadd [#allocation12], %s94
      %s97 = sshll.u32 [#allocation13], 4
      %s98 = int_to_ptr.vmem [resolvable:$true] %s97
      %100 = dma.hbm_to_vmem [thread:$0]  %s7, 96, %s98, [#allocation12]
    $region33: #{my_ensemble_forward.1} parent=1 // pred_fallthru
      _
    // Predicated region
    $region34: #{my_ensemble_forward.1} parent=1 // pred_check
      _
    $region35: #{my_ensemble_forward.1} parent=1 // pred_check_branch
      %102 = sbr.rel (0) target = $region37
    $region36: #{my_ensemble_forward.1} parent=1 // pred_region
      %s104 = ssub.s32 24576, 24576
      %105 = vsyncadd [#allocation15], %s104
      %s106 = sshll.u32 [#allocation14], 4
      %s107 = int_to_ptr.vmem [resolvable:$true] %s106
      %112 = dma.hbm_to_vmem [thread:$0]  %s8, 24576, %s107, [#allocation15], 128, 128, 8
    $region37: #{my_ensemble_forward.1} parent=1 // pred_fallthru
      _
    // Predicated region
    $region38: #{my_ensemble_forward.1} parent=1 // pred_check
      _
    $region39: #{my_ensemble_forward.1} parent=1 // pred_check_branch
      %114 = sbr.rel (0) target = $region41
    $region40: #{my_ensemble_forward.1} parent=1 // pred_region
      _
    $region41: #{my_ensemble_forward.1} parent=1 // pred_fallthru
      _
    // Predicated region
    $region42: #{my_ensemble_forward.1} parent=1 // pred_check
      _
    $region43: #{my_ensemble_forward.1} parent=1 // pred_check_branch
      %116 = sbr.rel (0) target = $region45
    $region44: #{my_ensemble_forward.1} parent=1 // pred_region
      %117 = dma.done [#allocation3], 32
    $region45: #{my_ensemble_forward.1} parent=1 // pred_fallthru
      _
    // Predicated region
    $region46: #{my_ensemble_forward.1} parent=1 // pred_check
      _
    $region47: #{my_ensemble_forward.1} parent=1 // pred_check_branch
      %119 = sbr.rel (0) target = $region49
    $region48: #{my_ensemble_forward.1} parent=1 // pred_region
      %120 = dma.done [#allocation6], 32
    $region49: #{my_ensemble_forward.1} parent=1 // pred_fallthru
      _
    // Predicated region
    $region50: #{my_ensemble_forward.1} parent=1 // pred_check
      _
    $region51: #{my_ensemble_forward.1} parent=1 // pred_check_branch
      %122 = sbr.rel (0) target = $region53
    $region52: #{my_ensemble_forward.1} parent=1 // pred_region
      %123 = dma.done [#allocation6], 512
    $region53: #{my_ensemble_forward.1} parent=1 // pred_fallthru
      _
    // Predicated region
    $region54: #{my_ensemble_forward.1} parent=1 // pred_check
      _
    $region55: #{my_ensemble_forward.1} parent=1 // pred_check_branch
      %125 = sbr.rel (0) target = $region57
    $region56: #{my_ensemble_forward.1} parent=1 // pred_region
      %126 = dma.done [#allocation9], 3072
    $region57: #{my_ensemble_forward.1} parent=1 // pred_fallthru
      _
    // Predicated region
    $region58: #{my_ensemble_forward.1} parent=1 // pred_check
      _
    $region59: #{my_ensemble_forward.1} parent=1 // pred_check_branch
      %128 = sbr.rel (0) target = $region61
    $region60: #{my_ensemble_forward.1} parent=1 // pred_region
      %129 = dma.done [#allocation9], 512
    $region61: #{my_ensemble_forward.1} parent=1 // pred_fallthru
      _
    // Predicated region
    $region62: #{my_ensemble_forward.1} parent=1 // pred_check
      _
    $region63: #{my_ensemble_forward.1} parent=1 // pred_check_branch
      %131 = sbr.rel (0) target = $region65
    $region64: #{my_ensemble_forward.1} parent=1 // pred_region
      %132 = dma.done [#allocation12], 3072
    $region65: #{my_ensemble_forward.1} parent=1 // pred_fallthru
      _
    // Predicated region
    $region66: #{my_ensemble_forward.1} parent=1 // pred_check
      _
    $region67: #{my_ensemble_forward.1} parent=1 // pred_check_branch
      %134 = sbr.rel (0) target = $region69
    $region68: #{my_ensemble_forward.1} parent=1 // pred_region
      %135 = dma.done [#allocation12], 96
    $region69: #{my_ensemble_forward.1} parent=1 // pred_fallthru
      _
    // Predicated region
    $region70: #{my_ensemble_forward.1} parent=1 // pred_check
      _
    $region71: #{my_ensemble_forward.1} parent=1 // pred_check_branch
      %137 = sbr.rel (0) target = $region73
    $region72: #{my_ensemble_forward.1} parent=1 // pred_region
      %138 = dma.done [#allocation15], 24576
    $region73: #{my_ensemble_forward.1} parent=1 // pred_fallthru
      _
    %v139 = vld [vmem:[#allocation2] sm:$0x3]
    %v140 = vld [vmem:[#allocation5] sm:$0x3]
    %v141 = vlaneseq
    %v142 = vand.u32 %v141, 127
    %v143 = vlaneseq
    %v144 = vshrl.u32 %v143, 7
    %v145 = vsub.s32 0, %v144
    %v146 = vrot.slane %v139, %v145
    %148 = vbcast.lane.b32.xlu0 %v146, 256
    %v149 = vpop.permute.xlu0 %148
    %v150 = vlaneseq
    %v151 = vshrl.u32 %v150, 7
    %v152 = vsub.s32 1, %v151
    %v153 = vrot.slane %v139, %v152
    %155 = vbcast.lane.b32.xlu0 %v153, 256
    %v156 = vpop.permute.xlu0 %155
    %vm157 = vcmp.eq.s32.totalorder %v149, %v142
    %vm158 = vcmp.eq.s32.totalorder %v156, %v142
    %v159 = vsel %vm157, 1, 0
    %v160 = vsel %vm158, 1, 0
    %v161 = vcvt.s32.f32 %v159
    %v162 = vcvt.s32.f32 %v160
    %vm163 = vcmask 58368
    %v164 = vsel %vm163, %v140, 0.0
    %165 = vadd.xlane.f32.xlu0 %v164
    %v166 = vpop.xlane.xlu0 %165
    %v167 = vmax.f32 %v166, 1.0
    %v168 = vlaneseq
    %v169 = vshrl.u32 %v168, 7
    %v170 = vsub.s32 0, %v169
    %v171 = vrot.slane %v140, %v170
    %173 = vbcast.lane.b32.xlu0 %v171, 256
    %v174 = vpop.permute.xlu0 %173
    %v175 = vlaneseq
    %v176 = vshrl.u32 %v175, 7
    %v177 = vsub.s32 1, %v176
    %v178 = vrot.slane %v140, %v177
    %180 = vbcast.lane.b32.xlu0 %v178, 256
    %v181 = vpop.permute.xlu0 %180
    %v182 = vmul.f32 %v161, %v174
    %v183 = vmul.f32 %v162, %v181
    %vm184 = vcmask 261120
    %v185 = vsel %vm184, %v182, 0.0
    %v186 = vrot.slane %v185, 4
    %v187 = vadd.f32 %v185, %v186
    %v188 = vrot.slane %v187, 2
    %v189 = vadd.f32 %v187, %v188
    %v190 = vrot.slane %v189, 1
    %v191 = vadd.f32 %v189, %v190
    %v192 = vsel %vm184, %v183, 0.0
    %v193 = vrot.slane %v192, 4
    %v194 = vadd.f32 %v192, %v193
    %v195 = vrot.slane %v194, 2
    %v196 = vadd.f32 %v194, %v195
    %v197 = vrot.slane %v196, 1
    %v198 = vadd.f32 %v196, %v197
    %v200 = vrot.slane %v167, 1
    %v203 = vrcp.pop %v167
    %v204 = vmul.f32 %v191, %v203
    %v205 = vrcp.pop %v200
    %v206 = vmul.f32 %v198, %v205
    %v207 = vld [vmem:[#allocation7] sm:$0xff]
    %v208 = vld [vmem:[#allocation7 + $0x8] sm:$0xff]
    %v209 = vld [vmem:[#allocation7 + $0x10] sm:$0xff]
    %v210 = vld [vmem:[#allocation7 + $0x18] sm:$0xff]
    %v213 = vrot.slane %v206, 7
    %vm214 = vcmask 1041409
    %v215 = vsel %vm214, %v213, %v204
    %v216 = vsel %vm184, %v215, 0
    %218 = vmatprep.subr.mxu0 0.0
    %219 = vmatpush1.msra.mxu0 %v207
    %220 = vmatprep.subr.mxu0 0.0
    %221 = vmatpush1.msra.mxu0 %v208
    %222 = vmatprep.subr.mxu0 0.0
    %223 = vmatpush1.msra.mxu0 %v209
    %224 = vmatprep.subr.mxu0 0.0
    %225 = vmatpush1.msra.mxu0 %v210
    %226 = vmatprep.subr.mxu0 0.0
    %227 = vmatpush1.msra.mxu0 0.0
    %228 = vmatprep.subr.mxu0 0.0
    %229 = vmatpush1.msra.mxu0 0.0
    %230 = vmatprep.subr.mxu0 0.0
    %231 = vmatpush1.msra.mxu0 0.0
    %232 = vmatprep.subr.mxu0 0.0
    %233 = vmatpush1.msra.mxu0 0.0
    %234 = vmatprep.subr.mxu0 0.0
    %235 = vmatpush1.msra.mxu0 0.0
    %236 = vmatprep.subr.mxu0 0.0
    %237 = vmatpush1.msra.mxu0 0.0
    %238 = vmatprep.subr.mxu0 0.0
    %239 = vmatpush1.msra.mxu0 0.0
    %240 = vmatprep.subr.mxu0 0.0
    %241 = vmatpush1.msra.mxu0 0.0
    %242 = vmatprep.subr.mxu0 0.0
    %243 = vmatpush1.msra.mxu0 0.0
    %244 = vmatprep.subr.mxu0 0.0
    %245 = vmatpush1.msra.mxu0 0.0
    %246 = vmatprep.subr.mxu0 0.0
    %247 = vmatpush1.msra.mxu0 0.0
    %248 = vmatprep.subr.mxu0 0.0
    %249 = vmatpush1.msra.mxu0 0.0
    %250 = vmatprep.subr.mxu0 0.0
    %251 = vmatpush1.msra.mxu0 0.0
    %252 = vmatprep.subr.mxu0 0.0
    %253 = vmatpush1.msra.mxu0 0.0
    %254 = vmatprep.subr.mxu0 0.0
    %255 = vmatpush1.msra.mxu0 0.0
    %256 = vmatprep.subr.mxu0 0.0
    %257 = vmatpush1.msra.mxu0 0.0
    %258 = vmatprep.subr.mxu0 0.0
    %259 = vmatpush1.msra.mxu0 0.0
    %260 = vmatprep.subr.mxu0 0.0
    %261 = vmatpush1.msra.mxu0 0.0
    %262 = vmatprep.subr.mxu0 0.0
    %263 = vmatpush1.msra.mxu0 0.0
    %264 = vmatprep.subr.mxu0 0.0
    %265 = vmatpush1.msra.mxu0 0.0
    %266 = vmatprep.subr.mxu0 0.0
    %267 = vmatpush1.msra.mxu0 0.0
    %268 = vmatprep.subr.mxu0 0.0
    %269 = vmatpush1.msra.mxu0 0.0
    %270 = vmatprep.subr.mxu0 0.0
    %271 = vmatpush1.msra.mxu0 0.0
    %272 = vmatprep.subr.mxu0 0.0
    %273 = vmatpush1.msra.mxu0 0.0
    %274 = vmatprep.subr.mxu0 0.0
    %275 = vmatpush1.msra.mxu0 0.0
    %276 = vmatprep.subr.mxu0 0.0
    %277 = vmatpush1.msra.mxu0 0.0
    %278 = vmatprep.subr.mxu0 0.0
    %279 = vmatpush1.msra.mxu0 0.0
    %280 = vmatprep.subr.mxu0 0.0
    %281 = vmatpush1.msra.mxu0 0.0
    %282 = vmatprep.mubr.f32.mxu0 0.0
    %283 = vmatmul.mubr.f32.gmra.mrb[0].mxu0 %v216
    %v284 = vpop.f32.mrb[0].mxu0
    %v285 = vadd.f32 0.0, %v284
    %v286 = vpop.f32.mrb[0].mxu0
    %287 = vdwg.mxu0
    %v288 = vld [vmem:[#allocation10] sm:$0xff]
    %v289 = vld [vmem:[#allocation10 + $0x8] sm:$0xff]
    %v290 = vld [vmem:[#allocation10 + $0x10] sm:$0xff]
    %v291 = vld [vmem:[#allocation10 + $0x18] sm:$0xff]
    %292 = vmatprep.subr.mxu0 0.0
    %293 = vmatpush1.msra.mxu0 %v288
    %294 = vmatprep.subr.mxu0 0.0
    %295 = vmatpush1.msra.mxu0 %v289
    %296 = vmatprep.subr.mxu0 0.0
    %297 = vmatpush1.msra.mxu0 %v290
    %298 = vmatprep.subr.mxu0 0.0
    %299 = vmatpush1.msra.mxu0 %v291
    %300 = vmatprep.subr.mxu0 0.0
    %301 = vmatpush1.msra.mxu0 0.0
    %302 = vmatprep.subr.mxu0 0.0
    %303 = vmatpush1.msra.mxu0 0.0
    %304 = vmatprep.subr.mxu0 0.0
    %305 = vmatpush1.msra.mxu0 0.0
    %306 = vmatprep.subr.mxu0 0.0
    %307 = vmatpush1.msra.mxu0 0.0
    %308 = vmatprep.subr.mxu0 0.0
    %309 = vmatpush1.msra.mxu0 0.0
    %310 = vmatprep.subr.mxu0 0.0
    %311 = vmatpush1.msra.mxu0 0.0
    %312 = vmatprep.subr.mxu0 0.0
    %313 = vmatpush1.msra.mxu0 0.0
    %314 = vmatprep.subr.mxu0 0.0
    %315 = vmatpush1.msra.mxu0 0.0
    %316 = vmatprep.subr.mxu0 0.0
    %317 = vmatpush1.msra.mxu0 0.0
    %318 = vmatprep.subr.mxu0 0.0
    %319 = vmatpush1.msra.mxu0 0.0
    %320 = vmatprep.subr.mxu0 0.0
    %321 = vmatpush1.msra.mxu0 0.0
    %322 = vmatprep.subr.mxu0 0.0
    %323 = vmatpush1.msra.mxu0 0.0
    %324 = vmatprep.subr.mxu0 0.0
    %325 = vmatpush1.msra.mxu0 0.0
    %326 = vmatprep.subr.mxu0 0.0
    %327 = vmatpush1.msra.mxu0 0.0
    %328 = vmatprep.subr.mxu0 0.0
    %329 = vmatpush1.msra.mxu0 0.0
    %330 = vmatprep.subr.mxu0 0.0
    %331 = vmatpush1.msra.mxu0 0.0
    %332 = vmatprep.subr.mxu0 0.0
    %333 = vmatpush1.msra.mxu0 0.0
    %334 = vmatprep.subr.mxu0 0.0
    %335 = vmatpush1.msra.mxu0 0.0
    %336 = vmatprep.subr.mxu0 0.0
    %337 = vmatpush1.msra.mxu0 0.0
    %338 = vmatprep.subr.mxu0 0.0
    %339 = vmatpush1.msra.mxu0 0.0
    %340 = vmatprep.subr.mxu0 0.0
    %341 = vmatpush1.msra.mxu0 0.0
    %342 = vmatprep.subr.mxu0 0.0
    %343 = vmatpush1.msra.mxu0 0.0
    %344 = vmatprep.subr.mxu0 0.0
    %345 = vmatpush1.msra.mxu0 0.0
    %346 = vmatprep.subr.mxu0 0.0
    %347 = vmatpush1.msra.mxu0 0.0
    %348 = vmatprep.subr.mxu0 0.0
    %349 = vmatpush1.msra.mxu0 0.0
    %350 = vmatprep.subr.mxu0 0.0
    %351 = vmatpush1.msra.mxu0 0.0
    %352 = vmatprep.subr.mxu0 0.0
    %353 = vmatpush1.msra.mxu0 0.0
    %354 = vmatprep.subr.mxu0 0.0
    %355 = vmatpush1.msra.mxu0 0.0
    %356 = vmatprep.mubr.f32.mxu0 0.0
    %357 = vmatmul.mubr.f32.gmra.mrb[0].mxu0 %v216
    %v358 = vpop.f32.mrb[0].mxu0
    %v359 = vadd.f32 0.0, %v358
    %v360 = vpop.f32.mrb[0].mxu0
    %361 = vdwg.mxu0
    %v362 = vld [vmem:[#allocation8] sm:$0xff]
    %v363 = vld [vmem:[#allocation8 + $0x8] sm:$0xff]
    %v364 = vld [vmem:[#allocation8 + $0x10] sm:$0xff]
    %v365 = vld [vmem:[#allocation8 + $0x18] sm:$0xff]
    %v366 = vld [vmem:[#allocation8 + $0x20] sm:$0xff]
    %v367 = vld [vmem:[#allocation8 + $0x28] sm:$0xff]
    %v368 = vld [vmem:[#allocation8 + $0x30] sm:$0xff]
    %v369 = vld [vmem:[#allocation8 + $0x38] sm:$0xff]
    %v370 = vld [vmem:[#allocation8 + $0x40] sm:$0xff]
    %v371 = vld [vmem:[#allocation8 + $0x48] sm:$0xff]
    %v372 = vld [vmem:[#allocation8 + $0x50] sm:$0xff]
    %v373 = vld [vmem:[#allocation8 + $0x58] sm:$0xff]
    %v374 = vld [vmem:[#allocation8 + $0x60] sm:$0xff]
    %v375 = vld [vmem:[#allocation8 + $0x68] sm:$0xff]
    %v376 = vld [vmem:[#allocation8 + $0x70] sm:$0xff]
    %v377 = vld [vmem:[#allocation8 + $0x78] sm:$0xff]
    %v378 = vld [vmem:[#allocation8 + $0x80] sm:$0xff]
    %v379 = vld [vmem:[#allocation8 + $0x88] sm:$0xff]
    %v380 = vld [vmem:[#allocation8 + $0x90] sm:$0xff]
    %v381 = vld [vmem:[#allocation8 + $0x98] sm:$0xff]
    %v382 = vld [vmem:[#allocation8 + $0xa0] sm:$0xff]
    %v383 = vld [vmem:[#allocation8 + $0xa8] sm:$0xff]
    %v384 = vld [vmem:[#allocation8 + $0xb0] sm:$0xff]
    %v385 = vld [vmem:[#allocation8 + $0xb8] sm:$0xff]
    %v386 = vld [vmem:[%s4] sm:$0x3f]
    %v388 = vlaneseq
    %v389 = vshrl.u32 %v388, 7
    %v390 = vsub.s32 0, %v389
    %v391 = vrot.slane %v386, %v390
    %v392 = vlaneseq
    %v393 = vshrl.u32 %v392, 7
    %v394 = vsub.s32 1, %v393
    %v395 = vrot.slane %v386, %v394
    %v396 = vlaneseq
    %v397 = vshrl.u32 %v396, 7
    %v398 = vsub.s32 2, %v397
    %v399 = vrot.slane %v386, %v398
    %v400 = vlaneseq
    %v401 = vshrl.u32 %v400, 7
    %v402 = vsub.s32 3, %v401
    %v403 = vrot.slane %v386, %v402
    %v404 = vlaneseq
    %v405 = vshrl.u32 %v404, 7
    %v406 = vsub.s32 4, %v405
    %v407 = vrot.slane %v386, %v406
    %v408 = vlaneseq
    %v409 = vshrl.u32 %v408, 7
    %v410 = vsub.s32 5, %v409
    %v411 = vrot.slane %v386, %v410
    %v419 = vsel %vm184, %v285, 0
    %421 = vmatprep.subr.mxu0 %v363
    %422 = vmatpush1.msra.mxu0 %v362
    %423 = vmatprep.subr.mxu0 %v369
    %424 = vmatpush1.msra.mxu0 %v368
    %425 = vmatprep.subr.mxu0 %v375
    %426 = vmatpush1.msra.mxu0 %v374
    %427 = vmatprep.subr.mxu0 %v381
    %428 = vmatpush1.msra.mxu0 %v380
    %429 = vmatprep.subr.mxu0 0.0
    %430 = vmatpush1.msra.mxu0 0.0
    %431 = vmatprep.subr.mxu0 0.0
    %432 = vmatpush1.msra.mxu0 0.0
    %433 = vmatprep.subr.mxu0 0.0
    %434 = vmatpush1.msra.mxu0 0.0
    %435 = vmatprep.subr.mxu0 0.0
    %436 = vmatpush1.msra.mxu0 0.0
    %437 = vmatprep.subr.mxu0 0.0
    %438 = vmatpush1.msra.mxu0 0.0
    %439 = vmatprep.subr.mxu0 0.0
    %440 = vmatpush1.msra.mxu0 0.0
    %441 = vmatprep.subr.mxu0 0.0
    %442 = vmatpush1.msra.mxu0 0.0
    %443 = vmatprep.subr.mxu0 0.0
    %444 = vmatpush1.msra.mxu0 0.0
    %445 = vmatprep.subr.mxu0 0.0
    %446 = vmatpush1.msra.mxu0 0.0
    %447 = vmatprep.subr.mxu0 0.0
    %448 = vmatpush1.msra.mxu0 0.0
    %449 = vmatprep.subr.mxu0 0.0
    %450 = vmatpush1.msra.mxu0 0.0
    %451 = vmatprep.subr.mxu0 0.0
    %452 = vmatpush1.msra.mxu0 0.0
    %453 = vmatprep.subr.mxu0 0.0
    %454 = vmatpush1.msra.mxu0 0.0
    %455 = vmatprep.subr.mxu0 0.0
    %456 = vmatpush1.msra.mxu0 0.0
    %457 = vmatprep.subr.mxu0 0.0
    %458 = vmatpush1.msra.mxu0 0.0
    %459 = vmatprep.subr.mxu0 0.0
    %460 = vmatpush1.msra.mxu0 0.0
    %461 = vmatprep.subr.mxu0 0.0
    %462 = vmatpush1.msra.mxu0 0.0
    %463 = vmatprep.subr.mxu0 0.0
    %464 = vmatpush1.msra.mxu0 0.0
    %465 = vmatprep.subr.mxu0 0.0
    %466 = vmatpush1.msra.mxu0 0.0
    %467 = vmatprep.subr.mxu0 0.0
    %468 = vmatpush1.msra.mxu0 0.0
    %469 = vmatprep.subr.mxu0 0.0
    %470 = vmatpush1.msra.mxu0 0.0
    %471 = vmatprep.subr.mxu0 0.0
    %472 = vmatpush1.msra.mxu0 0.0
    %473 = vmatprep.subr.mxu0 0.0
    %474 = vmatpush1.msra.mxu0 0.0
    %475 = vmatprep.subr.mxu0 0.0
    %476 = vmatpush1.msra.mxu0 0.0
    %477 = vmatprep.subr.mxu0 0.0
    %478 = vmatpush1.msra.mxu0 0.0
    %479 = vmatprep.subr.mxu0 0.0
    %480 = vmatpush1.msra.mxu0 0.0
    %481 = vmatprep.subr.mxu0 0.0
    %482 = vmatpush1.msra.mxu0 0.0
    %483 = vmatprep.subr.mxu0 0.0
    %484 = vmatpush1.msra.mxu0 0.0
    %485 = vmatprep.mubr.f32.mxu0 0.0
    %486 = vmatmul.mubr.f32.gmra.mrb[0].mxu0 %v419
    %v487 = vpop.f32.mrb[0].mxu0
    %v488 = vadd.f32 %v391, %v487
    %v489 = vpop.f32.mrb[0].mxu0
    %v490 = vadd.f32 %v395, %v489
    %491 = vdwg.mxu0
    %492 = vmatprep.subr.mxu0 %v365
    %493 = vmatpush1.msra.mxu0 %v364
    %494 = vmatprep.subr.mxu0 %v371
    %495 = vmatpush1.msra.mxu0 %v370
    %496 = vmatprep.subr.mxu0 %v377
    %497 = vmatpush1.msra.mxu0 %v376
    %498 = vmatprep.subr.mxu0 %v383
    %499 = vmatpush1.msra.mxu0 %v382
    %500 = vmatprep.subr.mxu0 0.0
    %501 = vmatpush1.msra.mxu0 0.0
    %502 = vmatprep.subr.mxu0 0.0
    %503 = vmatpush1.msra.mxu0 0.0
    %504 = vmatprep.subr.mxu0 0.0
    %505 = vmatpush1.msra.mxu0 0.0
    %506 = vmatprep.subr.mxu0 0.0
    %507 = vmatpush1.msra.mxu0 0.0
    %508 = vmatprep.subr.mxu0 0.0
    %509 = vmatpush1.msra.mxu0 0.0
    %510 = vmatprep.subr.mxu0 0.0
    %511 = vmatpush1.msra.mxu0 0.0
    %512 = vmatprep.subr.mxu0 0.0
    %513 = vmatpush1.msra.mxu0 0.0
    %514 = vmatprep.subr.mxu0 0.0
    %515 = vmatpush1.msra.mxu0 0.0
    %516 = vmatprep.subr.mxu0 0.0
    %517 = vmatpush1.msra.mxu0 0.0
    %518 = vmatprep.subr.mxu0 0.0
    %519 = vmatpush1.msra.mxu0 0.0
    %520 = vmatprep.subr.mxu0 0.0
    %521 = vmatpush1.msra.mxu0 0.0
    %522 = vmatprep.subr.mxu0 0.0
    %523 = vmatpush1.msra.mxu0 0.0
    %524 = vmatprep.subr.mxu0 0.0
    %525 = vmatpush1.msra.mxu0 0.0
    %526 = vmatprep.subr.mxu0 0.0
    %527 = vmatpush1.msra.mxu0 0.0
    %528 = vmatprep.subr.mxu0 0.0
    %529 = vmatpush1.msra.mxu0 0.0
    %530 = vmatprep.subr.mxu0 0.0
    %531 = vmatpush1.msra.mxu0 0.0
    %532 = vmatprep.subr.mxu0 0.0
    %533 = vmatpush1.msra.mxu0 0.0
    %534 = vmatprep.subr.mxu0 0.0
    %535 = vmatpush1.msra.mxu0 0.0
    %536 = vmatprep.subr.mxu0 0.0
    %537 = vmatpush1.msra.mxu0 0.0
    %538 = vmatprep.subr.mxu0 0.0
    %539 = vmatpush1.msra.mxu0 0.0
    %540 = vmatprep.subr.mxu0 0.0
    %541 = vmatpush1.msra.mxu0 0.0
    %542 = vmatprep.subr.mxu0 0.0
    %543 = vmatpush1.msra.mxu0 0.0
    %544 = vmatprep.subr.mxu0 0.0
    %545 = vmatpush1.msra.mxu0 0.0
    %546 = vmatprep.subr.mxu0 0.0
    %547 = vmatpush1.msra.mxu0 0.0
    %548 = vmatprep.subr.mxu0 0.0
    %549 = vmatpush1.msra.mxu0 0.0
    %550 = vmatprep.subr.mxu0 0.0
    %551 = vmatpush1.msra.mxu0 0.0
    %552 = vmatprep.subr.mxu0 0.0
    %553 = vmatpush1.msra.mxu0 0.0
    %554 = vmatprep.subr.mxu0 0.0
    %555 = vmatpush1.msra.mxu0 0.0
    %556 = vmatprep.mubr.f32.mxu0 0.0
    %557 = vmatmul.mubr.f32.gmra.mrb[0].mxu0 %v419
    %v558 = vpop.f32.mrb[0].mxu0
    %v559 = vadd.f32 %v399, %v558
    %v560 = vpop.f32.mrb[0].mxu0
    %v561 = vadd.f32 %v403, %v560
    %562 = vdwg.mxu0
    %563 = vmatprep.subr.mxu0 %v367
    %564 = vmatpush1.msra.mxu0 %v366
    %565 = vmatprep.subr.mxu0 %v373
    %566 = vmatpush1.msra.mxu0 %v372
    %567 = vmatprep.subr.mxu0 %v379
    %568 = vmatpush1.msra.mxu0 %v378
    %569 = vmatprep.subr.mxu0 %v385
    %570 = vmatpush1.msra.mxu0 %v384
    %571 = vmatprep.subr.mxu0 0.0
    %572 = vmatpush1.msra.mxu0 0.0
    %573 = vmatprep.subr.mxu0 0.0
    %574 = vmatpush1.msra.mxu0 0.0
    %575 = vmatprep.subr.mxu0 0.0
    %576 = vmatpush1.msra.mxu0 0.0
    %577 = vmatprep.subr.mxu0 0.0
    %578 = vmatpush1.msra.mxu0 0.0
    %579 = vmatprep.subr.mxu0 0.0
    %580 = vmatpush1.msra.mxu0 0.0
    %581 = vmatprep.subr.mxu0 0.0
    %582 = vmatpush1.msra.mxu0 0.0
    %583 = vmatprep.subr.mxu0 0.0
    %584 = vmatpush1.msra.mxu0 0.0
    %585 = vmatprep.subr.mxu0 0.0
    %586 = vmatpush1.msra.mxu0 0.0
    %587 = vmatprep.subr.mxu0 0.0
    %588 = vmatpush1.msra.mxu0 0.0
    %589 = vmatprep.subr.mxu0 0.0
    %590 = vmatpush1.msra.mxu0 0.0
    %591 = vmatprep.subr.mxu0 0.0
    %592 = vmatpush1.msra.mxu0 0.0
    %593 = vmatprep.subr.mxu0 0.0
    %594 = vmatpush1.msra.mxu0 0.0
    %595 = vmatprep.subr.mxu0 0.0
    %596 = vmatpush1.msra.mxu0 0.0
    %597 = vmatprep.subr.mxu0 0.0
    %598 = vmatpush1.msra.mxu0 0.0
    %599 = vmatprep.subr.mxu0 0.0
    %600 = vmatpush1.msra.mxu0 0.0
    %601 = vmatprep.subr.mxu0 0.0
    %602 = vmatpush1.msra.mxu0 0.0
    %603 = vmatprep.subr.mxu0 0.0
    %604 = vmatpush1.msra.mxu0 0.0
    %605 = vmatprep.subr.mxu0 0.0
    %606 = vmatpush1.msra.mxu0 0.0
    %607 = vmatprep.subr.mxu0 0.0
    %608 = vmatpush1.msra.mxu0 0.0
    %609 = vmatprep.subr.mxu0 0.0
    %610 = vmatpush1.msra.mxu0 0.0
    %611 = vmatprep.subr.mxu0 0.0
    %612 = vmatpush1.msra.mxu0 0.0
    %613 = vmatprep.subr.mxu0 0.0
    %614 = vmatpush1.msra.mxu0 0.0
    %615 = vmatprep.subr.mxu0 0.0
    %616 = vmatpush1.msra.mxu0 0.0
    %617 = vmatprep.subr.mxu0 0.0
    %618 = vmatpush1.msra.mxu0 0.0
    %619 = vmatprep.subr.mxu0 0.0
    %620 = vmatpush1.msra.mxu0 0.0
    %621 = vmatprep.subr.mxu0 0.0
    %622 = vmatpush1.msra.mxu0 0.0
    %623 = vmatprep.subr.mxu0 0.0
    %624 = vmatpush1.msra.mxu0 0.0
    %625 = vmatprep.subr.mxu0 0.0
    %626 = vmatpush1.msra.mxu0 0.0
    %627 = vmatprep.mubr.f32.mxu0 0.0
    %628 = vmatmul.mubr.f32.gmra.mrb[0].mxu0 %v419
    %v629 = vpop.f32.mrb[0].mxu0
    %v630 = vadd.f32 %v407, %v629
    %v631 = vpop.f32.mrb[0].mxu0
    %v632 = vadd.f32 %v411, %v631
    %633 = vdwg.mxu0
    %v634 = vtanh.pop %v488
    %v635 = vtanh.pop %v490
    %v636 = vtanh.pop %v559
    %v637 = vtanh.pop %v561
    %v638 = vtanh.pop %v630
    %v639 = vtanh.pop %v632
    %v640 = vld [vmem:[#allocation11] sm:$0xff]
    %v641 = vld [vmem:[#allocation11 + $0x8] sm:$0xff]
    %v642 = vld [vmem:[#allocation11 + $0x10] sm:$0xff]
    %v643 = vld [vmem:[#allocation11 + $0x18] sm:$0xff]
    %v644 = vld [vmem:[#allocation11 + $0x20] sm:$0xff]
    %v645 = vld [vmem:[#allocation11 + $0x28] sm:$0xff]
    %v646 = vld [vmem:[#allocation11 + $0x30] sm:$0xff]
    %v647 = vld [vmem:[#allocation11 + $0x38] sm:$0xff]
    %v648 = vld [vmem:[#allocation11 + $0x40] sm:$0xff]
    %v649 = vld [vmem:[#allocation11 + $0x48] sm:$0xff]
    %v650 = vld [vmem:[#allocation11 + $0x50] sm:$0xff]
    %v651 = vld [vmem:[#allocation11 + $0x58] sm:$0xff]
    %v652 = vld [vmem:[#allocation11 + $0x60] sm:$0xff]
    %v653 = vld [vmem:[#allocation11 + $0x68] sm:$0xff]
    %v654 = vld [vmem:[#allocation11 + $0x70] sm:$0xff]
    %v655 = vld [vmem:[#allocation11 + $0x78] sm:$0xff]
    %v656 = vld [vmem:[#allocation11 + $0x80] sm:$0xff]
    %v657 = vld [vmem:[#allocation11 + $0x88] sm:$0xff]
    %v658 = vld [vmem:[#allocation11 + $0x90] sm:$0xff]
    %v659 = vld [vmem:[#allocation11 + $0x98] sm:$0xff]
    %v660 = vld [vmem:[#allocation11 + $0xa0] sm:$0xff]
    %v661 = vld [vmem:[#allocation11 + $0xa8] sm:$0xff]
    %v662 = vld [vmem:[#allocation11 + $0xb0] sm:$0xff]
    %v663 = vld [vmem:[#allocation11 + $0xb8] sm:$0xff]
    %v664 = vld [vmem:[#allocation13] sm:$0x3f]
    %v666 = vlaneseq
    %v667 = vshrl.u32 %v666, 7
    %v668 = vsub.s32 0, %v667
    %v669 = vrot.slane %v664, %v668
    %v670 = vlaneseq
    %v671 = vshrl.u32 %v670, 7
    %v672 = vsub.s32 1, %v671
    %v673 = vrot.slane %v664, %v672
    %v674 = vlaneseq
    %v675 = vshrl.u32 %v674, 7
    %v676 = vsub.s32 2, %v675
    %v677 = vrot.slane %v664, %v676
    %v678 = vlaneseq
    %v679 = vshrl.u32 %v678, 7
    %v680 = vsub.s32 3, %v679
    %v681 = vrot.slane %v664, %v680
    %v682 = vlaneseq
    %v683 = vshrl.u32 %v682, 7
    %v684 = vsub.s32 4, %v683
    %v685 = vrot.slane %v664, %v684
    %v686 = vlaneseq
    %v687 = vshrl.u32 %v686, 7
    %v688 = vsub.s32 5, %v687
    %v689 = vrot.slane %v664, %v688
    %v697 = vsel %vm184, %v359, 0
    %699 = vmatprep.subr.mxu0 %v641
    %700 = vmatpush1.msra.mxu0 %v640
    %701 = vmatprep.subr.mxu0 %v647
    %702 = vmatpush1.msra.mxu0 %v646
    %703 = vmatprep.subr.mxu0 %v653
    %704 = vmatpush1.msra.mxu0 %v652
    %705 = vmatprep.subr.mxu0 %v659
    %706 = vmatpush1.msra.mxu0 %v658
    %707 = vmatprep.subr.mxu0 0.0
    %708 = vmatpush1.msra.mxu0 0.0
    %709 = vmatprep.subr.mxu0 0.0
    %710 = vmatpush1.msra.mxu0 0.0
    %711 = vmatprep.subr.mxu0 0.0
    %712 = vmatpush1.msra.mxu0 0.0
    %713 = vmatprep.subr.mxu0 0.0
    %714 = vmatpush1.msra.mxu0 0.0
    %715 = vmatprep.subr.mxu0 0.0
    %716 = vmatpush1.msra.mxu0 0.0
    %717 = vmatprep.subr.mxu0 0.0
    %718 = vmatpush1.msra.mxu0 0.0
    %719 = vmatprep.subr.mxu0 0.0
    %720 = vmatpush1.msra.mxu0 0.0
    %721 = vmatprep.subr.mxu0 0.0
    %722 = vmatpush1.msra.mxu0 0.0
    %723 = vmatprep.subr.mxu0 0.0
    %724 = vmatpush1.msra.mxu0 0.0
    %725 = vmatprep.subr.mxu0 0.0
    %726 = vmatpush1.msra.mxu0 0.0
    %727 = vmatprep.subr.mxu0 0.0
    %728 = vmatpush1.msra.mxu0 0.0
    %729 = vmatprep.subr.mxu0 0.0
    %730 = vmatpush1.msra.mxu0 0.0
    %731 = vmatprep.subr.mxu0 0.0
    %732 = vmatpush1.msra.mxu0 0.0
    %733 = vmatprep.subr.mxu0 0.0
    %734 = vmatpush1.msra.mxu0 0.0
    %735 = vmatprep.subr.mxu0 0.0
    %736 = vmatpush1.msra.mxu0 0.0
    %737 = vmatprep.subr.mxu0 0.0
    %738 = vmatpush1.msra.mxu0 0.0
    %739 = vmatprep.subr.mxu0 0.0
    %740 = vmatpush1.msra.mxu0 0.0
    %741 = vmatprep.subr.mxu0 0.0
    %742 = vmatpush1.msra.mxu0 0.0
    %743 = vmatprep.subr.mxu0 0.0
    %744 = vmatpush1.msra.mxu0 0.0
    %745 = vmatprep.subr.mxu0 0.0
    %746 = vmatpush1.msra.mxu0 0.0
    %747 = vmatprep.subr.mxu0 0.0
    %748 = vmatpush1.msra.mxu0 0.0
    %749 = vmatprep.subr.mxu0 0.0
    %750 = vmatpush1.msra.mxu0 0.0
    %751 = vmatprep.subr.mxu0 0.0
    %752 = vmatpush1.msra.mxu0 0.0
    %753 = vmatprep.subr.mxu0 0.0
    %754 = vmatpush1.msra.mxu0 0.0
    %755 = vmatprep.subr.mxu0 0.0
    %756 = vmatpush1.msra.mxu0 0.0
    %757 = vmatprep.subr.mxu0 0.0
    %758 = vmatpush1.msra.mxu0 0.0
    %759 = vmatprep.subr.mxu0 0.0
    %760 = vmatpush1.msra.mxu0 0.0
    %761 = vmatprep.subr.mxu0 0.0
    %762 = vmatpush1.msra.mxu0 0.0
    %763 = vmatprep.mubr.f32.mxu0 0.0
    %764 = vmatmul.mubr.f32.gmra.mrb[0].mxu0 %v697
    %v765 = vpop.f32.mrb[0].mxu0
    %v766 = vadd.f32 %v669, %v765
    %v767 = vpop.f32.mrb[0].mxu0
    %v768 = vadd.f32 %v673, %v767
    %769 = vdwg.mxu0
    %770 = vmatprep.subr.mxu0 %v643
    %771 = vmatpush1.msra.mxu0 %v642
    %772 = vmatprep.subr.mxu0 %v649
    %773 = vmatpush1.msra.mxu0 %v648
    %774 = vmatprep.subr.mxu0 %v655
    %775 = vmatpush1.msra.mxu0 %v654
    %776 = vmatprep.subr.mxu0 %v661
    %777 = vmatpush1.msra.mxu0 %v660
    %778 = vmatprep.subr.mxu0 0.0
    %779 = vmatpush1.msra.mxu0 0.0
    %780 = vmatprep.subr.mxu0 0.0
    %781 = vmatpush1.msra.mxu0 0.0
    %782 = vmatprep.subr.mxu0 0.0
    %783 = vmatpush1.msra.mxu0 0.0
    %784 = vmatprep.subr.mxu0 0.0
    %785 = vmatpush1.msra.mxu0 0.0
    %786 = vmatprep.subr.mxu0 0.0
    %787 = vmatpush1.msra.mxu0 0.0
    %788 = vmatprep.subr.mxu0 0.0
    %789 = vmatpush1.msra.mxu0 0.0
    %790 = vmatprep.subr.mxu0 0.0
    %791 = vmatpush1.msra.mxu0 0.0
    %792 = vmatprep.subr.mxu0 0.0
    %793 = vmatpush1.msra.mxu0 0.0
    %794 = vmatprep.subr.mxu0 0.0
    %795 = vmatpush1.msra.mxu0 0.0
    %796 = vmatprep.subr.mxu0 0.0
    %797 = vmatpush1.msra.mxu0 0.0
    %798 = vmatprep.subr.mxu0 0.0
    %799 = vmatpush1.msra.mxu0 0.0
    %800 = vmatprep.subr.mxu0 0.0
    %801 = vmatpush1.msra.mxu0 0.0
    %802 = vmatprep.subr.mxu0 0.0
    %803 = vmatpush1.msra.mxu0 0.0
    %804 = vmatprep.subr.mxu0 0.0
    %805 = vmatpush1.msra.mxu0 0.0
    %806 = vmatprep.subr.mxu0 0.0
    %807 = vmatpush1.msra.mxu0 0.0
    %808 = vmatprep.subr.mxu0 0.0
    %809 = vmatpush1.msra.mxu0 0.0
    %810 = vmatprep.subr.mxu0 0.0
    %811 = vmatpush1.msra.mxu0 0.0
    %812 = vmatprep.subr.mxu0 0.0
    %813 = vmatpush1.msra.mxu0 0.0
    %814 = vmatprep.subr.mxu0 0.0
    %815 = vmatpush1.msra.mxu0 0.0
    %816 = vmatprep.subr.mxu0 0.0
    %817 = vmatpush1.msra.mxu0 0.0
    %818 = vmatprep.subr.mxu0 0.0
    %819 = vmatpush1.msra.mxu0 0.0
    %820 = vmatprep.subr.mxu0 0.0
    %821 = vmatpush1.msra.mxu0 0.0
    %822 = vmatprep.subr.mxu0 0.0
    %823 = vmatpush1.msra.mxu0 0.0
    %824 = vmatprep.subr.mxu0 0.0
    %825 = vmatpush1.msra.mxu0 0.0
    %826 = vmatprep.subr.mxu0 0.0
    %827 = vmatpush1.msra.mxu0 0.0
    %828 = vmatprep.subr.mxu0 0.0
    %829 = vmatpush1.msra.mxu0 0.0
    %830 = vmatprep.subr.mxu0 0.0
    %831 = vmatpush1.msra.mxu0 0.0
    %832 = vmatprep.subr.mxu0 0.0
    %833 = vmatpush1.msra.mxu0 0.0
    %834 = vmatprep.mubr.f32.mxu0 0.0
    %835 = vmatmul.mubr.f32.gmra.mrb[0].mxu0 %v697
    %v836 = vpop.f32.mrb[0].mxu0
    %v837 = vadd.f32 %v677, %v836
    %v838 = vpop.f32.mrb[0].mxu0
    %v839 = vadd.f32 %v681, %v838
    %840 = vdwg.mxu0
    %841 = vmatprep.subr.mxu0 %v645
    %842 = vmatpush1.msra.mxu0 %v644
    %843 = vmatprep.subr.mxu0 %v651
    %844 = vmatpush1.msra.mxu0 %v650
    %845 = vmatprep.subr.mxu0 %v657
    %846 = vmatpush1.msra.mxu0 %v656
    %847 = vmatprep.subr.mxu0 %v663
    %848 = vmatpush1.msra.mxu0 %v662
    %849 = vmatprep.subr.mxu0 0.0
    %850 = vmatpush1.msra.mxu0 0.0
    %851 = vmatprep.subr.mxu0 0.0
    %852 = vmatpush1.msra.mxu0 0.0
    %853 = vmatprep.subr.mxu0 0.0
    %854 = vmatpush1.msra.mxu0 0.0
    %855 = vmatprep.subr.mxu0 0.0
    %856 = vmatpush1.msra.mxu0 0.0
    %857 = vmatprep.subr.mxu0 0.0
    %858 = vmatpush1.msra.mxu0 0.0
    %859 = vmatprep.subr.mxu0 0.0
    %860 = vmatpush1.msra.mxu0 0.0
    %861 = vmatprep.subr.mxu0 0.0
    %862 = vmatpush1.msra.mxu0 0.0
    %863 = vmatprep.subr.mxu0 0.0
    %864 = vmatpush1.msra.mxu0 0.0
    %865 = vmatprep.subr.mxu0 0.0
    %866 = vmatpush1.msra.mxu0 0.0
    %867 = vmatprep.subr.mxu0 0.0
    %868 = vmatpush1.msra.mxu0 0.0
    %869 = vmatprep.subr.mxu0 0.0
    %870 = vmatpush1.msra.mxu0 0.0
    %871 = vmatprep.subr.mxu0 0.0
    %872 = vmatpush1.msra.mxu0 0.0
    %873 = vmatprep.subr.mxu0 0.0
    %874 = vmatpush1.msra.mxu0 0.0
    %875 = vmatprep.subr.mxu0 0.0
    %876 = vmatpush1.msra.mxu0 0.0
    %877 = vmatprep.subr.mxu0 0.0
    %878 = vmatpush1.msra.mxu0 0.0
    %879 = vmatprep.subr.mxu0 0.0
    %880 = vmatpush1.msra.mxu0 0.0
    %881 = vmatprep.subr.mxu0 0.0
    %882 = vmatpush1.msra.mxu0 0.0
    %883 = vmatprep.subr.mxu0 0.0
    %884 = vmatpush1.msra.mxu0 0.0
    %885 = vmatprep.subr.mxu0 0.0
    %886 = vmatpush1.msra.mxu0 0.0
    %887 = vmatprep.subr.mxu0 0.0
    %888 = vmatpush1.msra.mxu0 0.0
    %889 = vmatprep.subr.mxu0 0.0
    %890 = vmatpush1.msra.mxu0 0.0
    %891 = vmatprep.subr.mxu0 0.0
    %892 = vmatpush1.msra.mxu0 0.0
    %893 = vmatprep.subr.mxu0 0.0
    %894 = vmatpush1.msra.mxu0 0.0
    %895 = vmatprep.subr.mxu0 0.0
    %896 = vmatpush1.msra.mxu0 0.0
    %897 = vmatprep.subr.mxu0 0.0
    %898 = vmatpush1.msra.mxu0 0.0
    %899 = vmatprep.subr.mxu0 0.0
    %900 = vmatpush1.msra.mxu0 0.0
    %901 = vmatprep.subr.mxu0 0.0
    %902 = vmatpush1.msra.mxu0 0.0
    %903 = vmatprep.subr.mxu0 0.0
    %904 = vmatpush1.msra.mxu0 0.0
    %905 = vmatprep.mubr.f32.mxu0 0.0
    %906 = vmatmul.mubr.f32.gmra.mrb[0].mxu0 %v697
    %v907 = vpop.f32.mrb[0].mxu0
    %v908 = vadd.f32 %v685, %v907
    %v909 = vpop.f32.mrb[0].mxu0
    %v910 = vadd.f32 %v689, %v909
    %911 = vdwg.mxu0
    %v912 = vtanh.pop %v766
    %v913 = vtanh.pop %v768
    %v914 = vtanh.pop %v837
    %v915 = vtanh.pop %v839
    %v916 = vtanh.pop %v908
    %v917 = vtanh.pop %v910
    %v918 = vmax.f32 %v634, 0.0
    %v919 = vmax.f32 %v635, 0.0
    %v920 = vmax.f32 %v636, 0.0
    %v921 = vmax.f32 %v637, 0.0
    %v922 = vmax.f32 %v638, 0.0
    %v923 = vmax.f32 %v639, 0.0
    %v924 = vmax.f32 %v912, 0.0
    %v925 = vmax.f32 %v913, 0.0
    %v926 = vmax.f32 %v914, 0.0
    %v927 = vmax.f32 %v915, 0.0
    %v928 = vmax.f32 %v916, 0.0
    %v929 = vmax.f32 %v917, 0.0
    %v930 = vld [vmem:[#allocation14] sm:$0xff]
    %v931 = vld [vmem:[#allocation14 + $0x8] sm:$0xff]
    %v932 = vld [vmem:[#allocation14 + $0x10] sm:$0xff]
    %v933 = vld [vmem:[#allocation14 + $0x18] sm:$0xff]
    %v934 = vld [vmem:[#allocation14 + $0x20] sm:$0xff]
    %v935 = vld [vmem:[#allocation14 + $0x28] sm:$0xff]
    %v936 = vld [vmem:[#allocation14 + $0x30] sm:$0xff]
    %v937 = vld [vmem:[#allocation14 + $0x38] sm:$0xff]
    %v938 = vld [vmem:[#allocation14 + $0x40] sm:$0xff]
    %v939 = vld [vmem:[#allocation14 + $0x48] sm:$0xff]
    %v940 = vld [vmem:[#allocation14 + $0x50] sm:$0xff]
    %v941 = vld [vmem:[#allocation14 + $0x58] sm:$0xff]
    %v942 = vld [vmem:[#allocation14 + $0x60] sm:$0xff]
    %v943 = vld [vmem:[#allocation14 + $0x68] sm:$0xff]
    %v944 = vld [vmem:[#allocation14 + $0x70] sm:$0xff]
    %v945 = vld [vmem:[#allocation14 + $0x78] sm:$0xff]
    %v946 = vld [vmem:[#allocation14 + $0x80] sm:$0xff]
    %v947 = vld [vmem:[#allocation14 + $0x88] sm:$0xff]
    %v948 = vld [vmem:[#allocation14 + $0x90] sm:$0xff]
    %v949 = vld [vmem:[#allocation14 + $0x98] sm:$0xff]
    %v950 = vld [vmem:[#allocation14 + $0xa0] sm:$0xff]
    %v951 = vld [vmem:[#allocation14 + $0xa8] sm:$0xff]
    %v952 = vld [vmem:[#allocation14 + $0xb0] sm:$0xff]
    %v953 = vld [vmem:[#allocation14 + $0xb8] sm:$0xff]
    %v954 = vld [vmem:[#allocation14 + $0xc0] sm:$0xff]
    %v955 = vld [vmem:[#allocation14 + $0xc8] sm:$0xff]
    %v956 = vld [vmem:[#allocation14 + $0xd0] sm:$0xff]
    %v957 = vld [vmem:[#allocation14 + $0xd8] sm:$0xff]
    %v958 = vld [vmem:[#allocation14 + $0xe0] sm:$0xff]
    %v959 = vld [vmem:[#allocation14 + $0xe8] sm:$0xff]
    %v960 = vld [vmem:[#allocation14 + $0xf0] sm:$0xff]
    %v961 = vld [vmem:[#allocation14 + $0xf8] sm:$0xff]
    %v962 = vld [vmem:[#allocation14 + $0x100] sm:$0xff]
    %v963 = vld [vmem:[#allocation14 + $0x108] sm:$0xff]
    %v964 = vld [vmem:[#allocation14 + $0x110] sm:$0xff]
    %v965 = vld [vmem:[#allocation14 + $0x118] sm:$0xff]
    %v966 = vld [vmem:[#allocation14 + $0x120] sm:$0xff]
    %v967 = vld [vmem:[#allocation14 + $0x128] sm:$0xff]
    %v968 = vld [vmem:[#allocation14 + $0x130] sm:$0xff]
    %v969 = vld [vmem:[#allocation14 + $0x138] sm:$0xff]
    %v970 = vld [vmem:[#allocation14 + $0x140] sm:$0xff]
    %v971 = vld [vmem:[#allocation14 + $0x148] sm:$0xff]
    %v972 = vld [vmem:[#allocation14 + $0x150] sm:$0xff]
    %v973 = vld [vmem:[#allocation14 + $0x158] sm:$0xff]
    %v974 = vld [vmem:[#allocation14 + $0x160] sm:$0xff]
    %v975 = vld [vmem:[#allocation14 + $0x168] sm:$0xff]
    %v976 = vld [vmem:[#allocation14 + $0x170] sm:$0xff]
    %v977 = vld [vmem:[#allocation14 + $0x178] sm:$0xff]
    %v978 = vld [vmem:[#allocation14 + $0x180] sm:$0xff]
    %v979 = vld [vmem:[#allocation14 + $0x188] sm:$0xff]
    %v980 = vld [vmem:[#allocation14 + $0x190] sm:$0xff]
    %v981 = vld [vmem:[#allocation14 + $0x198] sm:$0xff]
    %v982 = vld [vmem:[#allocation14 + $0x1a0] sm:$0xff]
    %v983 = vld [vmem:[#allocation14 + $0x1a8] sm:$0xff]
    %v984 = vld [vmem:[#allocation14 + $0x1b0] sm:$0xff]
    %v985 = vld [vmem:[#allocation14 + $0x1b8] sm:$0xff]
    %v986 = vld [vmem:[#allocation14 + $0x1c0] sm:$0xff]
    %v987 = vld [vmem:[#allocation14 + $0x1c8] sm:$0xff]
    %v988 = vld [vmem:[#allocation14 + $0x1d0] sm:$0xff]
    %v989 = vld [vmem:[#allocation14 + $0x1d8] sm:$0xff]
    %v990 = vld [vmem:[#allocation14 + $0x1e0] sm:$0xff]
    %v991 = vld [vmem:[#allocation14 + $0x1e8] sm:$0xff]
    %v992 = vld [vmem:[#allocation14 + $0x1f0] sm:$0xff]
    %v993 = vld [vmem:[#allocation14 + $0x1f8] sm:$0xff]
    %v994 = vld [vmem:[#allocation14 + $0x200] sm:$0xff]
    %v995 = vld [vmem:[#allocation14 + $0x208] sm:$0xff]
    %v996 = vld [vmem:[#allocation14 + $0x210] sm:$0xff]
    %v997 = vld [vmem:[#allocation14 + $0x218] sm:$0xff]
    %v998 = vld [vmem:[#allocation14 + $0x220] sm:$0xff]
    %v999 = vld [vmem:[#allocation14 + $0x228] sm:$0xff]
    %v1000 = vld [vmem:[#allocation14 + $0x230] sm:$0xff]
    %v1001 = vld [vmem:[#allocation14 + $0x238] sm:$0xff]
    %v1002 = vld [vmem:[#allocation14 + $0x240] sm:$0xff]
    %v1003 = vld [vmem:[#allocation14 + $0x248] sm:$0xff]
    %v1004 = vld [vmem:[#allocation14 + $0x250] sm:$0xff]
    %v1005 = vld [vmem:[#allocation14 + $0x258] sm:$0xff]
    %v1006 = vld [vmem:[#allocation14 + $0x260] sm:$0xff]
    %v1007 = vld [vmem:[#allocation14 + $0x268] sm:$0xff]
    %v1008 = vld [vmem:[#allocation14 + $0x270] sm:$0xff]
    %v1009 = vld [vmem:[#allocation14 + $0x278] sm:$0xff]
    %v1010 = vld [vmem:[#allocation14 + $0x280] sm:$0xff]
    %v1011 = vld [vmem:[#allocation14 + $0x288] sm:$0xff]
    %v1012 = vld [vmem:[#allocation14 + $0x290] sm:$0xff]
    %v1013 = vld [vmem:[#allocation14 + $0x298] sm:$0xff]
    %v1014 = vld [vmem:[#allocation14 + $0x2a0] sm:$0xff]
    %v1015 = vld [vmem:[#allocation14 + $0x2a8] sm:$0xff]
    %v1016 = vld [vmem:[#allocation14 + $0x2b0] sm:$0xff]
    %v1017 = vld [vmem:[#allocation14 + $0x2b8] sm:$0xff]
    %v1018 = vld [vmem:[#allocation14 + $0x2c0] sm:$0xff]
    %v1019 = vld [vmem:[#allocation14 + $0x2c8] sm:$0xff]
    %v1020 = vld [vmem:[#allocation14 + $0x2d0] sm:$0xff]
    %v1021 = vld [vmem:[#allocation14 + $0x2d8] sm:$0xff]
    %v1022 = vld [vmem:[#allocation14 + $0x2e0] sm:$0xff]
    %v1023 = vld [vmem:[#allocation14 + $0x2e8] sm:$0xff]
    %v1024 = vld [vmem:[#allocation14 + $0x2f0] sm:$0xff]
    %v1025 = vld [vmem:[#allocation14 + $0x2f8] sm:$0xff]
    %v1026 = vld [vmem:[#allocation14 + $0x300] sm:$0xff]
    %v1027 = vld [vmem:[#allocation14 + $0x308] sm:$0xff]
    %v1028 = vld [vmem:[#allocation14 + $0x310] sm:$0xff]
    %v1029 = vld [vmem:[#allocation14 + $0x318] sm:$0xff]
    %v1030 = vld [vmem:[#allocation14 + $0x320] sm:$0xff]
    %v1031 = vld [vmem:[#allocation14 + $0x328] sm:$0xff]
    %v1032 = vld [vmem:[#allocation14 + $0x330] sm:$0xff]
    %v1033 = vld [vmem:[#allocation14 + $0x338] sm:$0xff]
    %v1034 = vld [vmem:[#allocation14 + $0x340] sm:$0xff]
    %v1035 = vld [vmem:[#allocation14 + $0x348] sm:$0xff]
    %v1036 = vld [vmem:[#allocation14 + $0x350] sm:$0xff]
    %v1037 = vld [vmem:[#allocation14 + $0x358] sm:$0xff]
    %v1038 = vld [vmem:[#allocation14 + $0x360] sm:$0xff]
    %v1039 = vld [vmem:[#allocation14 + $0x368] sm:$0xff]
    %v1040 = vld [vmem:[#allocation14 + $0x370] sm:$0xff]
    %v1041 = vld [vmem:[#allocation14 + $0x378] sm:$0xff]
    %v1042 = vld [vmem:[#allocation14 + $0x380] sm:$0xff]
    %v1043 = vld [vmem:[#allocation14 + $0x388] sm:$0xff]
    %v1044 = vld [vmem:[#allocation14 + $0x390] sm:$0xff]
    %v1045 = vld [vmem:[#allocation14 + $0x398] sm:$0xff]
    %v1046 = vld [vmem:[#allocation14 + $0x3a0] sm:$0xff]
    %v1047 = vld [vmem:[#allocation14 + $0x3a8] sm:$0xff]
    %v1048 = vld [vmem:[#allocation14 + $0x3b0] sm:$0xff]
    %v1049 = vld [vmem:[#allocation14 + $0x3b8] sm:$0xff]
    %v1050 = vld [vmem:[#allocation14 + $0x3c0] sm:$0xff]
    %v1051 = vld [vmem:[#allocation14 + $0x3c8] sm:$0xff]
    %v1052 = vld [vmem:[#allocation14 + $0x3d0] sm:$0xff]
    %v1053 = vld [vmem:[#allocation14 + $0x3d8] sm:$0xff]
    %v1054 = vld [vmem:[#allocation14 + $0x3e0] sm:$0xff]
    %v1055 = vld [vmem:[#allocation14 + $0x3e8] sm:$0xff]
    %v1056 = vld [vmem:[#allocation14 + $0x3f0] sm:$0xff]
    %v1057 = vld [vmem:[#allocation14 + $0x3f8] sm:$0xff]
    %v1058 = vld [vmem:[#allocation14 + $0x400] sm:$0xff]
    %v1059 = vld [vmem:[#allocation14 + $0x408] sm:$0xff]
    %v1060 = vld [vmem:[#allocation14 + $0x410] sm:$0xff]
    %v1061 = vld [vmem:[#allocation14 + $0x418] sm:$0xff]
    %v1062 = vld [vmem:[#allocation14 + $0x420] sm:$0xff]
    %v1063 = vld [vmem:[#allocation14 + $0x428] sm:$0xff]
    %v1064 = vld [vmem:[#allocation14 + $0x430] sm:$0xff]
    %v1065 = vld [vmem:[#allocation14 + $0x438] sm:$0xff]
    %v1066 = vld [vmem:[#allocation14 + $0x440] sm:$0xff]
    %v1067 = vld [vmem:[#allocation14 + $0x448] sm:$0xff]
    %v1068 = vld [vmem:[#allocation14 + $0x450] sm:$0xff]
    %v1069 = vld [vmem:[#allocation14 + $0x458] sm:$0xff]
    %v1070 = vld [vmem:[#allocation14 + $0x460] sm:$0xff]
    %v1071 = vld [vmem:[#allocation14 + $0x468] sm:$0xff]
    %v1072 = vld [vmem:[#allocation14 + $0x470] sm:$0xff]
    %v1073 = vld [vmem:[#allocation14 + $0x478] sm:$0xff]
    %v1074 = vld [vmem:[#allocation14 + $0x480] sm:$0xff]
    %v1075 = vld [vmem:[#allocation14 + $0x488] sm:$0xff]
    %v1076 = vld [vmem:[#allocation14 + $0x490] sm:$0xff]
    %v1077 = vld [vmem:[#allocation14 + $0x498] sm:$0xff]
    %v1078 = vld [vmem:[#allocation14 + $0x4a0] sm:$0xff]
    %v1079 = vld [vmem:[#allocation14 + $0x4a8] sm:$0xff]
    %v1080 = vld [vmem:[#allocation14 + $0x4b0] sm:$0xff]
    %v1081 = vld [vmem:[#allocation14 + $0x4b8] sm:$0xff]
    %v1082 = vld [vmem:[#allocation14 + $0x4c0] sm:$0xff]
    %v1083 = vld [vmem:[#allocation14 + $0x4c8] sm:$0xff]
    %v1084 = vld [vmem:[#allocation14 + $0x4d0] sm:$0xff]
    %v1085 = vld [vmem:[#allocation14 + $0x4d8] sm:$0xff]
    %v1086 = vld [vmem:[#allocation14 + $0x4e0] sm:$0xff]
    %v1087 = vld [vmem:[#allocation14 + $0x4e8] sm:$0xff]
    %v1088 = vld [vmem:[#allocation14 + $0x4f0] sm:$0xff]
    %v1089 = vld [vmem:[#allocation14 + $0x4f8] sm:$0xff]
    %v1090 = vld [vmem:[#allocation14 + $0x500] sm:$0xff]
    %v1091 = vld [vmem:[#allocation14 + $0x508] sm:$0xff]
    %v1092 = vld [vmem:[#allocation14 + $0x510] sm:$0xff]
    %v1093 = vld [vmem:[#allocation14 + $0x518] sm:$0xff]
    %v1094 = vld [vmem:[#allocation14 + $0x520] sm:$0xff]
    %v1095 = vld [vmem:[#allocation14 + $0x528] sm:$0xff]
    %v1096 = vld [vmem:[#allocation14 + $0x530] sm:$0xff]
    %v1097 = vld [vmem:[#allocation14 + $0x538] sm:$0xff]
    %v1098 = vld [vmem:[#allocation14 + $0x540] sm:$0xff]
    %v1099 = vld [vmem:[#allocation14 + $0x548] sm:$0xff]
    %v1100 = vld [vmem:[#allocation14 + $0x550] sm:$0xff]
    %v1101 = vld [vmem:[#allocation14 + $0x558] sm:$0xff]
    %v1102 = vld [vmem:[#allocation14 + $0x560] sm:$0xff]
    %v1103 = vld [vmem:[#allocation14 + $0x568] sm:$0xff]
    %v1104 = vld [vmem:[#allocation14 + $0x570] sm:$0xff]
    %v1105 = vld [vmem:[#allocation14 + $0x578] sm:$0xff]
    %v1106 = vld [vmem:[#allocation14 + $0x580] sm:$0xff]
    %v1107 = vld [vmem:[#allocation14 + $0x588] sm:$0xff]
    %v1108 = vld [vmem:[#allocation14 + $0x590] sm:$0xff]
    %v1109 = vld [vmem:[#allocation14 + $0x598] sm:$0xff]
    %v1110 = vld [vmem:[#allocation14 + $0x5a0] sm:$0xff]
    %v1111 = vld [vmem:[#allocation14 + $0x5a8] sm:$0xff]
    %v1112 = vld [vmem:[#allocation14 + $0x5b0] sm:$0xff]
    %v1113 = vld [vmem:[#allocation14 + $0x5b8] sm:$0xff]
    %v1114 = vld [vmem:[#allocation14 + $0x5c0] sm:$0xff]
    %v1115 = vld [vmem:[#allocation14 + $0x5c8] sm:$0xff]
    %v1116 = vld [vmem:[#allocation14 + $0x5d0] sm:$0xff]
    %v1117 = vld [vmem:[#allocation14 + $0x5d8] sm:$0xff]
    %v1118 = vld [vmem:[#allocation14 + $0x5e0] sm:$0xff]
    %v1119 = vld [vmem:[#allocation14 + $0x5e8] sm:$0xff]
    %v1120 = vld [vmem:[#allocation14 + $0x5f0] sm:$0xff]
    %v1121 = vld [vmem:[#allocation14 + $0x5f8] sm:$0xff]
    %1122 = vmatprep.subr.mxu0 0.0
    %1123 = vmatpush1.msra.mxu0 %v1026
    %1124 = vmatprep.subr.mxu0 0.0
    %1125 = vmatpush1.msra.mxu0 %v1027
    %1126 = vmatprep.subr.mxu0 0.0
    %1127 = vmatpush1.msra.mxu0 %v1028
    %1128 = vmatprep.subr.mxu0 0.0
    %1129 = vmatpush1.msra.mxu0 %v1029
    %1130 = vmatprep.subr.mxu0 0.0
    %1131 = vmatpush1.msra.mxu0 %v1030
    %1132 = vmatprep.subr.mxu0 0.0
    %1133 = vmatpush1.msra.mxu0 %v1031
    %1134 = vmatprep.subr.mxu0 0.0
    %1135 = vmatpush1.msra.mxu0 %v1032
    %1136 = vmatprep.subr.mxu0 0.0
    %1137 = vmatpush1.msra.mxu0 %v1033
    %1138 = vmatprep.subr.mxu0 0.0
    %1139 = vmatpush1.msra.mxu0 %v1034
    %1140 = vmatprep.subr.mxu0 0.0
    %1141 = vmatpush1.msra.mxu0 %v1035
    %1142 = vmatprep.subr.mxu0 0.0
    %1143 = vmatpush1.msra.mxu0 %v1036
    %1144 = vmatprep.subr.mxu0 0.0
    %1145 = vmatpush1.msra.mxu0 %v1037
    %1146 = vmatprep.subr.mxu0 0.0
    %1147 = vmatpush1.msra.mxu0 %v1038
    %1148 = vmatprep.subr.mxu0 0.0
    %1149 = vmatpush1.msra.mxu0 %v1039
    %1150 = vmatprep.subr.mxu0 0.0
    %1151 = vmatpush1.msra.mxu0 %v1040
    %1152 = vmatprep.subr.mxu0 0.0
    %1153 = vmatpush1.msra.mxu0 %v1041
    %1154 = vmatprep.subr.mxu0 0.0
    %1155 = vmatpush1.msra.mxu0 %v1042
    %1156 = vmatprep.subr.mxu0 0.0
    %1157 = vmatpush1.msra.mxu0 %v1043
    %1158 = vmatprep.subr.mxu0 0.0
    %1159 = vmatpush1.msra.mxu0 %v1044
    %1160 = vmatprep.subr.mxu0 0.0
    %1161 = vmatpush1.msra.mxu0 %v1045
    %1162 = vmatprep.subr.mxu0 0.0
    %1163 = vmatpush1.msra.mxu0 %v1046
    %1164 = vmatprep.subr.mxu0 0.0
    %1165 = vmatpush1.msra.mxu0 %v1047
    %1166 = vmatprep.subr.mxu0 0.0
    %1167 = vmatpush1.msra.mxu0 %v1048
    %1168 = vmatprep.subr.mxu0 0.0
    %1169 = vmatpush1.msra.mxu0 %v1049
    %1170 = vmatprep.subr.mxu0 0.0
    %1171 = vmatpush1.msra.mxu0 %v1050
    %1172 = vmatprep.subr.mxu0 0.0
    %1173 = vmatpush1.msra.mxu0 %v1051
    %1174 = vmatprep.subr.mxu0 0.0
    %1175 = vmatpush1.msra.mxu0 %v1052
    %1176 = vmatprep.subr.mxu0 0.0
    %1177 = vmatpush1.msra.mxu0 %v1053
    %1178 = vmatprep.subr.mxu0 0.0
    %1179 = vmatpush1.msra.mxu0 %v1054
    %1180 = vmatprep.subr.mxu0 0.0
    %1181 = vmatpush1.msra.mxu0 %v1055
    %1182 = vmatprep.subr.mxu0 0.0
    %1183 = vmatpush1.msra.mxu0 %v1056
    %1184 = vmatprep.subr.mxu0 0.0
    %1185 = vmatpush1.msra.mxu0 %v1057
    %1186 = vmatprep.mubr.f32.mxu0 %v925
    %1187 = vmatmul.mubr.f32.gmra.mrb[0].mxu0 %v924
    %v1188 = vpop.f32.mrb[0].mxu0
    %v1189 = vadd.f32 0.0, %v1188
    %v1190 = vpop.f32.mrb[0].mxu0
    %1191 = vdwg.mxu0
    %1192 = vmatprep.subr.mxu0 0.0
    %1193 = vmatpush1.msra.mxu0 %v1058
    %1194 = vmatprep.subr.mxu0 0.0
    %1195 = vmatpush1.msra.mxu0 %v1059
    %1196 = vmatprep.subr.mxu0 0.0
    %1197 = vmatpush1.msra.mxu0 %v1060
    %1198 = vmatprep.subr.mxu0 0.0
    %1199 = vmatpush1.msra.mxu0 %v1061
    %1200 = vmatprep.subr.mxu0 0.0
    %1201 = vmatpush1.msra.mxu0 %v1062
    %1202 = vmatprep.subr.mxu0 0.0
    %1203 = vmatpush1.msra.mxu0 %v1063
    %1204 = vmatprep.subr.mxu0 0.0
    %1205 = vmatpush1.msra.mxu0 %v1064
    %1206 = vmatprep.subr.mxu0 0.0
    %1207 = vmatpush1.msra.mxu0 %v1065
    %1208 = vmatprep.subr.mxu0 0.0
    %1209 = vmatpush1.msra.mxu0 %v1066
    %1210 = vmatprep.subr.mxu0 0.0
    %1211 = vmatpush1.msra.mxu0 %v1067
    %1212 = vmatprep.subr.mxu0 0.0
    %1213 = vmatpush1.msra.mxu0 %v1068
    %1214 = vmatprep.subr.mxu0 0.0
    %1215 = vmatpush1.msra.mxu0 %v1069
    %1216 = vmatprep.subr.mxu0 0.0
    %1217 = vmatpush1.msra.mxu0 %v1070
    %1218 = vmatprep.subr.mxu0 0.0
    %1219 = vmatpush1.msra.mxu0 %v1071
    %1220 = vmatprep.subr.mxu0 0.0
    %1221 = vmatpush1.msra.mxu0 %v1072
    %1222 = vmatprep.subr.mxu0 0.0
    %1223 = vmatpush1.msra.mxu0 %v1073
    %1224 = vmatprep.subr.mxu0 0.0
    %1225 = vmatpush1.msra.mxu0 %v1074
    %1226 = vmatprep.subr.mxu0 0.0
    %1227 = vmatpush1.msra.mxu0 %v1075
    %1228 = vmatprep.subr.mxu0 0.0
    %1229 = vmatpush1.msra.mxu0 %v1076
    %1230 = vmatprep.subr.mxu0 0.0
    %1231 = vmatpush1.msra.mxu0 %v1077
    %1232 = vmatprep.subr.mxu0 0.0
    %1233 = vmatpush1.msra.mxu0 %v1078
    %1234 = vmatprep.subr.mxu0 0.0
    %1235 = vmatpush1.msra.mxu0 %v1079
    %1236 = vmatprep.subr.mxu0 0.0
    %1237 = vmatpush1.msra.mxu0 %v1080
    %1238 = vmatprep.subr.mxu0 0.0
    %1239 = vmatpush1.msra.mxu0 %v1081
    %1240 = vmatprep.subr.mxu0 0.0
    %1241 = vmatpush1.msra.mxu0 %v1082
    %1242 = vmatprep.subr.mxu0 0.0
    %1243 = vmatpush1.msra.mxu0 %v1083
    %1244 = vmatprep.subr.mxu0 0.0
    %1245 = vmatpush1.msra.mxu0 %v1084
    %1246 = vmatprep.subr.mxu0 0.0
    %1247 = vmatpush1.msra.mxu0 %v1085
    %1248 = vmatprep.subr.mxu0 0.0
    %1249 = vmatpush1.msra.mxu0 %v1086
    %1250 = vmatprep.subr.mxu0 0.0
    %1251 = vmatpush1.msra.mxu0 %v1087
    %1252 = vmatprep.subr.mxu0 0.0
    %1253 = vmatpush1.msra.mxu0 %v1088
    %1254 = vmatprep.subr.mxu0 0.0
    %1255 = vmatpush1.msra.mxu0 %v1089
    %1256 = vmatprep.mubr.f32.mxu0 %v927
    %1257 = vmatmul.mubr.f32.gmra.mrb[0].mxu0 %v926
    %v1258 = vpop.f32.mrb[0].mxu0
    %v1259 = vadd.f32 %v1189, %v1258
    %v1260 = vpop.f32.mrb[0].mxu0
    %1261 = vdwg.mxu0
    %1262 = vmatprep.subr.mxu0 0.0
    %1263 = vmatpush1.msra.mxu0 %v1090
    %1264 = vmatprep.subr.mxu0 0.0
    %1265 = vmatpush1.msra.mxu0 %v1091
    %1266 = vmatprep.subr.mxu0 0.0
    %1267 = vmatpush1.msra.mxu0 %v1092
    %1268 = vmatprep.subr.mxu0 0.0
    %1269 = vmatpush1.msra.mxu0 %v1093
    %1270 = vmatprep.subr.mxu0 0.0
    %1271 = vmatpush1.msra.mxu0 %v1094
    %1272 = vmatprep.subr.mxu0 0.0
    %1273 = vmatpush1.msra.mxu0 %v1095
    %1274 = vmatprep.subr.mxu0 0.0
    %1275 = vmatpush1.msra.mxu0 %v1096
    %1276 = vmatprep.subr.mxu0 0.0
    %1277 = vmatpush1.msra.mxu0 %v1097
    %1278 = vmatprep.subr.mxu0 0.0
    %1279 = vmatpush1.msra.mxu0 %v1098
    %1280 = vmatprep.subr.mxu0 0.0
    %1281 = vmatpush1.msra.mxu0 %v1099
    %1282 = vmatprep.subr.mxu0 0.0
    %1283 = vmatpush1.msra.mxu0 %v1100
    %1284 = vmatprep.subr.mxu0 0.0
    %1285 = vmatpush1.msra.mxu0 %v1101
    %1286 = vmatprep.subr.mxu0 0.0
    %1287 = vmatpush1.msra.mxu0 %v1102
    %1288 = vmatprep.subr.mxu0 0.0
    %1289 = vmatpush1.msra.mxu0 %v1103
    %1290 = vmatprep.subr.mxu0 0.0
    %1291 = vmatpush1.msra.mxu0 %v1104
    %1292 = vmatprep.subr.mxu0 0.0
    %1293 = vmatpush1.msra.mxu0 %v1105
    %1294 = vmatprep.subr.mxu0 0.0
    %1295 = vmatpush1.msra.mxu0 %v1106
    %1296 = vmatprep.subr.mxu0 0.0
    %1297 = vmatpush1.msra.mxu0 %v1107
    %1298 = vmatprep.subr.mxu0 0.0
    %1299 = vmatpush1.msra.mxu0 %v1108
    %1300 = vmatprep.subr.mxu0 0.0
    %1301 = vmatpush1.msra.mxu0 %v1109
    %1302 = vmatprep.subr.mxu0 0.0
    %1303 = vmatpush1.msra.mxu0 %v1110
    %1304 = vmatprep.subr.mxu0 0.0
    %1305 = vmatpush1.msra.mxu0 %v1111
    %1306 = vmatprep.subr.mxu0 0.0
    %1307 = vmatpush1.msra.mxu0 %v1112
    %1308 = vmatprep.subr.mxu0 0.0
    %1309 = vmatpush1.msra.mxu0 %v1113
    %1310 = vmatprep.subr.mxu0 0.0
    %1311 = vmatpush1.msra.mxu0 %v1114
    %1312 = vmatprep.subr.mxu0 0.0
    %1313 = vmatpush1.msra.mxu0 %v1115
    %1314 = vmatprep.subr.mxu0 0.0
    %1315 = vmatpush1.msra.mxu0 %v1116
    %1316 = vmatprep.subr.mxu0 0.0
    %1317 = vmatpush1.msra.mxu0 %v1117
    %1318 = vmatprep.subr.mxu0 0.0
    %1319 = vmatpush1.msra.mxu0 %v1118
    %1320 = vmatprep.subr.mxu0 0.0
    %1321 = vmatpush1.msra.mxu0 %v1119
    %1322 = vmatprep.subr.mxu0 0.0
    %1323 = vmatpush1.msra.mxu0 %v1120
    %1324 = vmatprep.subr.mxu0 0.0
    %1325 = vmatpush1.msra.mxu0 %v1121
    %1326 = vmatprep.mubr.f32.mxu0 %v929
    %1327 = vmatmul.mubr.f32.gmra.mrb[0].mxu0 %v928
    %v1328 = vpop.f32.mrb[0].mxu0
    %v1329 = vadd.f32 %v1259, %v1328
    %v1330 = vpop.f32.mrb[0].mxu0
    %1331 = vdwg.mxu0
    %1332 = vmatprep.subr.mxu0 0.0
    %1333 = vmatpush1.msra.mxu0 %v930
    %1334 = vmatprep.subr.mxu0 0.0
    %1335 = vmatpush1.msra.mxu0 %v931
    %1336 = vmatprep.subr.mxu0 0.0
    %1337 = vmatpush1.msra.mxu0 %v932
    %1338 = vmatprep.subr.mxu0 0.0
    %1339 = vmatpush1.msra.mxu0 %v933
    %1340 = vmatprep.subr.mxu0 0.0
    %1341 = vmatpush1.msra.mxu0 %v934
    %1342 = vmatprep.subr.mxu0 0.0
    %1343 = vmatpush1.msra.mxu0 %v935
    %1344 = vmatprep.subr.mxu0 0.0
    %1345 = vmatpush1.msra.mxu0 %v936
    %1346 = vmatprep.subr.mxu0 0.0
    %1347 = vmatpush1.msra.mxu0 %v937
    %1348 = vmatprep.subr.mxu0 0.0
    %1349 = vmatpush1.msra.mxu0 %v938
    %1350 = vmatprep.subr.mxu0 0.0
    %1351 = vmatpush1.msra.mxu0 %v939
    %1352 = vmatprep.subr.mxu0 0.0
    %1353 = vmatpush1.msra.mxu0 %v940
    %1354 = vmatprep.subr.mxu0 0.0
    %1355 = vmatpush1.msra.mxu0 %v941
    %1356 = vmatprep.subr.mxu0 0.0
    %1357 = vmatpush1.msra.mxu0 %v942
    %1358 = vmatprep.subr.mxu0 0.0
    %1359 = vmatpush1.msra.mxu0 %v943
    %1360 = vmatprep.subr.mxu0 0.0
    %1361 = vmatpush1.msra.mxu0 %v944
    %1362 = vmatprep.subr.mxu0 0.0
    %1363 = vmatpush1.msra.mxu0 %v945
    %1364 = vmatprep.subr.mxu0 0.0
    %1365 = vmatpush1.msra.mxu0 %v946
    %1366 = vmatprep.subr.mxu0 0.0
    %1367 = vmatpush1.msra.mxu0 %v947
    %1368 = vmatprep.subr.mxu0 0.0
    %1369 = vmatpush1.msra.mxu0 %v948
    %1370 = vmatprep.subr.mxu0 0.0
    %1371 = vmatpush1.msra.mxu0 %v949
    %1372 = vmatprep.subr.mxu0 0.0
    %1373 = vmatpush1.msra.mxu0 %v950
    %1374 = vmatprep.subr.mxu0 0.0
    %1375 = vmatpush1.msra.mxu0 %v951
    %1376 = vmatprep.subr.mxu0 0.0
    %1377 = vmatpush1.msra.mxu0 %v952
    %1378 = vmatprep.subr.mxu0 0.0
    %1379 = vmatpush1.msra.mxu0 %v953
    %1380 = vmatprep.subr.mxu0 0.0
    %1381 = vmatpush1.msra.mxu0 %v954
    %1382 = vmatprep.subr.mxu0 0.0
    %1383 = vmatpush1.msra.mxu0 %v955
    %1384 = vmatprep.subr.mxu0 0.0
    %1385 = vmatpush1.msra.mxu0 %v956
    %1386 = vmatprep.subr.mxu0 0.0
    %1387 = vmatpush1.msra.mxu0 %v957
    %1388 = vmatprep.subr.mxu0 0.0
    %1389 = vmatpush1.msra.mxu0 %v958
    %1390 = vmatprep.subr.mxu0 0.0
    %1391 = vmatpush1.msra.mxu0 %v959
    %1392 = vmatprep.subr.mxu0 0.0
    %1393 = vmatpush1.msra.mxu0 %v960
    %1394 = vmatprep.subr.mxu0 0.0
    %1395 = vmatpush1.msra.mxu0 %v961
    %1396 = vmatprep.mubr.f32.mxu0 %v919
    %1397 = vmatmul.mubr.f32.gmra.mrb[0].mxu0 %v918
    %v1398 = vpop.f32.mrb[0].mxu0
    %v1399 = vadd.f32 %v1329, %v1398
    %v1400 = vpop.f32.mrb[0].mxu0
    %1401 = vdwg.mxu0
    %1402 = vmatprep.subr.mxu0 0.0
    %1403 = vmatpush1.msra.mxu0 %v962
    %1404 = vmatprep.subr.mxu0 0.0
    %1405 = vmatpush1.msra.mxu0 %v963
    %1406 = vmatprep.subr.mxu0 0.0
    %1407 = vmatpush1.msra.mxu0 %v964
    %1408 = vmatprep.subr.mxu0 0.0
    %1409 = vmatpush1.msra.mxu0 %v965
    %1410 = vmatprep.subr.mxu0 0.0
    %1411 = vmatpush1.msra.mxu0 %v966
    %1412 = vmatprep.subr.mxu0 0.0
    %1413 = vmatpush1.msra.mxu0 %v967
    %1414 = vmatprep.subr.mxu0 0.0
    %1415 = vmatpush1.msra.mxu0 %v968
    %1416 = vmatprep.subr.mxu0 0.0
    %1417 = vmatpush1.msra.mxu0 %v969
    %1418 = vmatprep.subr.mxu0 0.0
    %1419 = vmatpush1.msra.mxu0 %v970
    %1420 = vmatprep.subr.mxu0 0.0
    %1421 = vmatpush1.msra.mxu0 %v971
    %1422 = vmatprep.subr.mxu0 0.0
    %1423 = vmatpush1.msra.mxu0 %v972
    %1424 = vmatprep.subr.mxu0 0.0
    %1425 = vmatpush1.msra.mxu0 %v973
    %1426 = vmatprep.subr.mxu0 0.0
    %1427 = vmatpush1.msra.mxu0 %v974
    %1428 = vmatprep.subr.mxu0 0.0
    %1429 = vmatpush1.msra.mxu0 %v975
    %1430 = vmatprep.subr.mxu0 0.0
    %1431 = vmatpush1.msra.mxu0 %v976
    %1432 = vmatprep.subr.mxu0 0.0
    %1433 = vmatpush1.msra.mxu0 %v977
    %1434 = vmatprep.subr.mxu0 0.0
    %1435 = vmatpush1.msra.mxu0 %v978
    %1436 = vmatprep.subr.mxu0 0.0
    %1437 = vmatpush1.msra.mxu0 %v979
    %1438 = vmatprep.subr.mxu0 0.0
    %1439 = vmatpush1.msra.mxu0 %v980
    %1440 = vmatprep.subr.mxu0 0.0
    %1441 = vmatpush1.msra.mxu0 %v981
    %1442 = vmatprep.subr.mxu0 0.0
    %1443 = vmatpush1.msra.mxu0 %v982
    %1444 = vmatprep.subr.mxu0 0.0
    %1445 = vmatpush1.msra.mxu0 %v983
    %1446 = vmatprep.subr.mxu0 0.0
    %1447 = vmatpush1.msra.mxu0 %v984
    %1448 = vmatprep.subr.mxu0 0.0
    %1449 = vmatpush1.msra.mxu0 %v985
    %1450 = vmatprep.subr.mxu0 0.0
    %1451 = vmatpush1.msra.mxu0 %v986
    %1452 = vmatprep.subr.mxu0 0.0
    %1453 = vmatpush1.msra.mxu0 %v987
    %1454 = vmatprep.subr.mxu0 0.0
    %1455 = vmatpush1.msra.mxu0 %v988
    %1456 = vmatprep.subr.mxu0 0.0
    %1457 = vmatpush1.msra.mxu0 %v989
    %1458 = vmatprep.subr.mxu0 0.0
    %1459 = vmatpush1.msra.mxu0 %v990
    %1460 = vmatprep.subr.mxu0 0.0
    %1461 = vmatpush1.msra.mxu0 %v991
    %1462 = vmatprep.subr.mxu0 0.0
    %1463 = vmatpush1.msra.mxu0 %v992
    %1464 = vmatprep.subr.mxu0 0.0
    %1465 = vmatpush1.msra.mxu0 %v993
    %1466 = vmatprep.mubr.f32.mxu0 %v921
    %1467 = vmatmul.mubr.f32.gmra.mrb[0].mxu0 %v920
    %v1468 = vpop.f32.mrb[0].mxu0
    %v1469 = vadd.f32 %v1399, %v1468
    %v1470 = vpop.f32.mrb[0].mxu0
    %1471 = vdwg.mxu0
    %1472 = vmatprep.subr.mxu0 0.0
    %1473 = vmatpush1.msra.mxu0 %v994
    %1474 = vmatprep.subr.mxu0 0.0
    %1475 = vmatpush1.msra.mxu0 %v995
    %1476 = vmatprep.subr.mxu0 0.0
    %1477 = vmatpush1.msra.mxu0 %v996
    %1478 = vmatprep.subr.mxu0 0.0
    %1479 = vmatpush1.msra.mxu0 %v997
    %1480 = vmatprep.subr.mxu0 0.0
    %1481 = vmatpush1.msra.mxu0 %v998
    %1482 = vmatprep.subr.mxu0 0.0
    %1483 = vmatpush1.msra.mxu0 %v999
    %1484 = vmatprep.subr.mxu0 0.0
    %1485 = vmatpush1.msra.mxu0 %v1000
    %1486 = vmatprep.subr.mxu0 0.0
    %1487 = vmatpush1.msra.mxu0 %v1001
    %1488 = vmatprep.subr.mxu0 0.0
    %1489 = vmatpush1.msra.mxu0 %v1002
    %1490 = vmatprep.subr.mxu0 0.0
    %1491 = vmatpush1.msra.mxu0 %v1003
    %1492 = vmatprep.subr.mxu0 0.0
    %1493 = vmatpush1.msra.mxu0 %v1004
    %1494 = vmatprep.subr.mxu0 0.0
    %1495 = vmatpush1.msra.mxu0 %v1005
    %1496 = vmatprep.subr.mxu0 0.0
    %1497 = vmatpush1.msra.mxu0 %v1006
    %1498 = vmatprep.subr.mxu0 0.0
    %1499 = vmatpush1.msra.mxu0 %v1007
    %1500 = vmatprep.subr.mxu0 0.0
    %1501 = vmatpush1.msra.mxu0 %v1008
    %1502 = vmatprep.subr.mxu0 0.0
    %1503 = vmatpush1.msra.mxu0 %v1009
    %1504 = vmatprep.subr.mxu0 0.0
    %1505 = vmatpush1.msra.mxu0 %v1010
    %1506 = vmatprep.subr.mxu0 0.0
    %1507 = vmatpush1.msra.mxu0 %v1011
    %1508 = vmatprep.subr.mxu0 0.0
    %1509 = vmatpush1.msra.mxu0 %v1012
    %1510 = vmatprep.subr.mxu0 0.0
    %1511 = vmatpush1.msra.mxu0 %v1013
    %1512 = vmatprep.subr.mxu0 0.0
    %1513 = vmatpush1.msra.mxu0 %v1014
    %1514 = vmatprep.subr.mxu0 0.0
    %1515 = vmatpush1.msra.mxu0 %v1015
    %1516 = vmatprep.subr.mxu0 0.0
    %1517 = vmatpush1.msra.mxu0 %v1016
    %1518 = vmatprep.subr.mxu0 0.0
    %1519 = vmatpush1.msra.mxu0 %v1017
    %1520 = vmatprep.subr.mxu0 0.0
    %1521 = vmatpush1.msra.mxu0 %v1018
    %1522 = vmatprep.subr.mxu0 0.0
    %1523 = vmatpush1.msra.mxu0 %v1019
    %1524 = vmatprep.subr.mxu0 0.0
    %1525 = vmatpush1.msra.mxu0 %v1020
    %1526 = vmatprep.subr.mxu0 0.0
    %1527 = vmatpush1.msra.mxu0 %v1021
    %1528 = vmatprep.subr.mxu0 0.0
    %1529 = vmatpush1.msra.mxu0 %v1022
    %1530 = vmatprep.subr.mxu0 0.0
    %1531 = vmatpush1.msra.mxu0 %v1023
    %1532 = vmatprep.subr.mxu0 0.0
    %1533 = vmatpush1.msra.mxu0 %v1024
    %1534 = vmatprep.subr.mxu0 0.0
    %1535 = vmatpush1.msra.mxu0 %v1025
    %1536 = vmatprep.mubr.f32.mxu0 %v923
    %1537 = vmatmul.mubr.f32.gmra.mrb[0].mxu0 %v922
    %v1538 = vpop.f32.mrb[0].mxu0
    %v1539 = vadd.f32 %v1469, %v1538
    %v1540 = vpop.f32.mrb[0].mxu0
    %1541 = vdwg.mxu0
    %v1542 = vld [vmem:[%s9] sm:$0x1]
    %v1544 = vlaneseq
    %v1545 = vshrl.u32 %v1544, 7
    %v1546 = vsub.s32 0, %v1545
    %v1547 = vrot.slane %v1542, %v1546
    %v1549 = vadd.f32 %v1539, %v1547
    %1550 = vst [vmem:[#allocation16] sm:$0x3] %v1549
    // Predicated region
    $region74: #{my_ensemble_forward.1} parent=1 // pred_check
      _
    $region75: #{my_ensemble_forward.1} parent=1 // pred_check_branch
      %1552 = sbr.rel (0) target = $region77
    $region76: #{my_ensemble_forward.1} parent=1 // pred_region
      %s1554 = ssub.s32 32, 32
      %1555 = vsyncadd [#allocation4], %s1554
      %s1557 = sshll.u32 [#allocation16], 4
      %s1558 = int_to_ptr.vmem [resolvable:$true] %s1557
      %1560 = dma.vmem_to_hbm [thread:$0]  %s1558, 32, %s10, [#allocation4]
    $region77: #{my_ensemble_forward.1} parent=1 // pred_fallthru
      _
    // Predicated region
    $region78: #{my_ensemble_forward.1} parent=1 // pred_check
      _
    $region79: #{my_ensemble_forward.1} parent=1 // pred_check_branch
      %1562 = sbr.rel (0) target = $region81
    $region80: #{my_ensemble_forward.1} parent=1 // pred_region
      %1563 = dma.done [#allocation4], 32
    $region81: #{my_ensemble_forward.1} parent=1 // pred_fallthru
      _
    %1564 = vsyncpa [#allocation3], 1
    %1565 = vsyncpa [#allocation6], 1
    %1566 = vsyncpa [#allocation9], 1
    %1567 = vsyncpa [#allocation12], 1
    %1568 = vsyncpa [#allocation15], 1
    %1569 = vsyncpa [#allocation4], 1

</llo_original>
